<compile_context>
chip_gen: v7x
topology: tpu7x:2x2x1
jax: 0.10.0
libtpu: 0.0.40
codegen_flags: <defaults>
</compile_context>

<pallas_src>
import functools

import numpy as np
import jax
import jax.numpy as jnp
from jax.experimental import pallas as pl


# -----------------------------------------------------------------------------
# Fused Pallas kernel: LSTM layer 1 -> LSTM layer 2 -> last-step FC + ReLU
# -----------------------------------------------------------------------------
def _shared_encoder_kernel(x_ref, wih1_ref, whh1_ref, b1_ref,
                           wih2_ref, whh2_ref, b2_ref,
                           fcw_ref, fcb_ref, out_ref, *, T, B):
    """
    x_ref    : (T*B, Din) bf16  time-major rows (row = t*B + b)
    wih1_ref : (Din, 4H)  bf16  layer-1 input weights, pre-transposed
    whh1_ref : (H,   4H)  bf16  layer-1 recurrent weights, pre-transposed
    b1_ref   : (1,   4H)  f32   layer-1 combined bias (b_ih + b_hh)
    wih2_ref : (H,   4H)  bf16  layer-2 input weights, pre-transposed
    whh2_ref : (H,   4H)  bf16  layer-2 recurrent weights, pre-transposed
    b2_ref   : (1,   4H)  f32   layer-2 combined bias
    fcw_ref  : (H, Hout)  bf16  fc weight, pre-transposed
    fcb_ref  : (1, Hout)  f32   fc bias
    out_ref  : (B, Hout)  f32   relu(fc(h2_T))
    """
    H = whh1_ref.shape[0]

    def cell(gates, c_prev):
        # gates: (B, 4H) f32, PyTorch gate order [i, f, g, o].
        # Two full-vreg EUP passes, then lane slices (XLU slot has slack).
        sg = jax.nn.sigmoid(gates)
        tg = jnp.tanh(gates)
        i = sg[:, 0 * H:1 * H]
        f = sg[:, 1 * H:2 * H]
        g = tg[:, 2 * H:3 * H]
        o = sg[:, 3 * H:4 * H]
        c_new = f * c_prev + i * g
        h_new = o * jnp.tanh(c_new)
        return h_new, c_new

    # ---- Layer 1: batched input projection (one MXU push, M = T*B) ---------
    # Bias folded in here, once, instead of once per timestep.
    xg1 = jnp.dot(x_ref[...], wih1_ref[...],
                  preferred_element_type=jnp.float32) + b1_ref[...]   # (T*B, 4H) f32

    zeros = jnp.zeros((B, H), jnp.float32)
    h1, c1 = zeros, zeros
    h2, c2 = zeros, zeros
    xg2_rows = []

    # ---- Layer 1 recurrence: only h @ Whh remains on the serial chain ------
    for t in range(T):                                   # static unroll (small T)
        g1 = xg1[t * B:(t + 1) * B, :] + jnp.dot(
            h1.astype(jnp.bfloat16), whh1_ref[...],
            preferred_element_type=jnp.float32)
        h1, c1 = cell(g1, c1)
        # Layer-2 input projection for step t: depends only on h1_t, so it is
        # off layer-2's recurrent critical path and overlaps layer-1's chain.
        xg2_rows.append(
            jnp.dot(h1.astype(jnp.bfloat16), wih2_ref[...],
                    preferred_element_type=jnp.float32) + b2_ref[...])

    # ---- Layer 2 recurrence (inter-layer dropout: eval-mode no-op) ---------
    for t in range(T):
        g2 = xg2_rows[t] + jnp.dot(
            h2.astype(jnp.bfloat16), whh2_ref[...],
            preferred_element_type=jnp.float32)
        h2, c2 = cell(g2, c2)

    # ---- Final FC + ReLU on last timestep of the top layer -----------------
    y = jnp.dot(h2.astype(jnp.bfloat16), fcw_ref[...],
                preferred_element_type=jnp.float32) + fcb_ref[...]
    out_ref[...] = jnp.maximum(y, 0.0).astype(out_ref.dtype)


# -----------------------------------------------------------------------------
# Wrapper
# -----------------------------------------------------------------------------
def shared_encoder_forward(x, kp):
    """Matches SharedEncoder.forward (use_lstm=True, num_layers=2, eval mode).

    x:  (B, T, input_dim) batch_first, or (B, input_dim) -> unsqueezed to T=1.
    kp: kernel-layout params from prepare_kernel_params().
    """
    if x.ndim == 2:
        x = x[:, None, :]                      # (B, 1, D)
    B, T, Din = x.shape
    H = kp["w_hh1"].shape[0]
    H_out = kp["fc_w"].shape[1]

    # Time-major flatten (row = t*B + b): the transpose of the tiny input is a
    # negligible host-side op and buys contiguous static per-step gate slices
    # inside the kernel.  MXU operands are bf16; accumulation stays f32.
    x_tb = jnp.transpose(x, (1, 0, 2)).reshape(T * B, Din).astype(jnp.bfloat16)

    def full(shape):
        return pl.BlockSpec(shape, lambda: (0,) * len(shape))

    kernel = functools.partial(_shared_encoder_kernel, T=T, B=B)
    return pl.pallas_call(
        kernel,
        out_shape=jax.ShapeDtypeStruct((B, H_out), jnp.float32),
        in_specs=[
            full((T * B, Din)),
            full((Din, 4 * H)),
            full((H, 4 * H)),
            full((1, 4 * H)),
            full((H, 4 * H)),
            full((H, 4 * H)),
            full((1, 4 * H)),
            full((H, H_out)),
            full((1, H_out)),
        ],
        out_specs=full((B, H_out)),
    )(x_tb, kp["w_ih1"], kp["w_hh1"], kp["b1"],
      kp["w_ih2"], kp["w_hh2"], kp["b2"], kp["fc_w"], kp["fc_b"])


# -----------------------------------------------------------------------------
# Deterministic parameter init (PyTorch-style uniform(-1/sqrt(H), 1/sqrt(H)))
# in PyTorch layout, plus conversion to the kernel layout.
# -----------------------------------------------------------------------------
def init_params(key, input_dim, hidden_dim, num_layers):
    k = 1.0 / np.sqrt(hidden_dim)
    layers = []
    for layer in range(num_layers):
        din = input_dim if layer == 0 else hidden_dim
        key, k1, k2, k3, k4 = jax.random.split(key, 5)
        layers.append({
            "w_ih": jax.random.uniform(k1, (4 * hidden_dim, din), jnp.float32, -k, k),
            "w_hh": jax.random.uniform(k2, (4 * hidden_dim, hidden_dim), jnp.float32, -k, k),
            "b_ih": jax.random.uniform(k3, (4 * hidden_dim,), jnp.float32, -k, k),
            "b_hh": jax.random.uniform(k4, (4 * hidden_dim,), jnp.float32, -k, k),
        })
    key, k5, k6 = jax.random.split(key, 3)
    fc_w = jax.random.uniform(k5, (hidden_dim, hidden_dim), jnp.float32, -k, k)
    fc_b = jax.random.uniform(k6, (hidden_dim,), jnp.float32, -k, k)
    return {"lstm": layers, "fc_w": fc_w, "fc_b": fc_b}


def prepare_kernel_params(p):
    """Pre-transpose / pre-combine weights once on the host.

    Matmul operands are bf16 (MXU); biases stay f32 (VPU path, v5e-safe).
    """
    assert len(p["lstm"]) == 2, "fused kernel is specialized to num_layers=2"
    l0, l1 = p["lstm"]
    return {
        "w_ih1": l0["w_ih"].T.astype(jnp.bfloat16),              # (Din, 4H)
        "w_hh1": l0["w_hh"].T.astype(jnp.bfloat16),              # (H,   4H)
        "b1": (l0["b_ih"] + l0["b_hh"])[None, :].astype(jnp.float32),  # (1, 4H)
        "w_ih2": l1["w_ih"].T.astype(jnp.bfloat16),              # (H,   4H)
        "w_hh2": l1["w_hh"].T.astype(jnp.bfloat16),              # (H,   4H)
        "b2": (l1["b_ih"] + l1["b_hh"])[None, :].astype(jnp.float32),  # (1, 4H)
        "fc_w": p["fc_w"].T.astype(jnp.bfloat16),                # (H, Hout)
        "fc_b": p["fc_b"][None, :].astype(jnp.float32),          # (1, Hout)
    }


# -----------------------------------------------------------------------------
# Pure-JAX f32 reference (PyTorch-layout params) for correctness check
# -----------------------------------------------------------------------------
def reference_forward(x, params):
    if x.ndim == 2:
        x = x[:, None, :]
    B = x.shape[0]
    h_seq = jnp.transpose(x, (1, 0, 2)).astype(jnp.float32)  # (T, B, D)
    T = h_seq.shape[0]
    for layer in params["lstm"]:
        w_ih, w_hh = layer["w_ih"], layer["w_hh"]
        b = layer["b_ih"] + layer["b_hh"]
        H = w_hh.shape[1]
        h = jnp.zeros((B, H), jnp.float32)
        c = jnp.zeros((B, H), jnp.float32)
        outs = []
        for t in range(T):
            gates = h_seq[t] @ w_ih.T + h @ w_hh.T + b
            i = jax.nn.sigmoid(gates[:, 0 * H:1 * H])
            f = jax.nn.sigmoid(gates[:, 1 * H:2 * H])
            g = jnp.tanh(gates[:, 2 * H:3 * H])
            o = jax.nn.sigmoid(gates[:, 3 * H:4 * H])
            c = f * c + i * g
            h = o * jnp.tanh(c)
            outs.append(h)
        h_seq = jnp.stack(outs, axis=0)
    h_last = h_seq[-1]
    return jnp.maximum(h_last @ params["fc_w"].T + params["fc_b"], 0.0)


# -----------------------------------------------------------------------------
if __name__ == "__main__":
    B, T = 2, 8
    input_dim, hidden_dim, num_layers = 32, 32, 2

    key = jax.random.PRNGKey(0)
    key, pkey, xkey = jax.random.split(key, 3)
    raw_params = init_params(pkey, input_dim, hidden_dim, num_layers)
    kp = prepare_kernel_params(raw_params)
    x = jax.random.normal(xkey, (B, T, input_dim), jnp.float32)

    out = jax.block_until_ready(shared_encoder_forward(x, kp))
    ref = jax.block_until_ready(reference_forward(x, raw_params))

    # bf16 MXU operands (f32 accumulation / state) vs. pure-f32 reference.
    np.testing.assert_allclose(np.asarray(out), np.asarray(ref), rtol=2e-2, atol=2e-2)
    assert out.shape == (B, hidden_dim)

    print("KERNEL_OK")
</pallas_src>

<mosaic_0001>
module attributes {stable_mosaic.version = 11 : i64} {
  func.func @_shared_encoder_kernel(%arg0: memref<16x32xbf16, #tpu.memory_space<vmem>>, %arg1: memref<32x128xbf16, #tpu.memory_space<vmem>>, %arg2: memref<32x128xbf16, #tpu.memory_space<vmem>>, %arg3: memref<1x128xf32, #tpu.memory_space<vmem>>, %arg4: memref<32x128xbf16, #tpu.memory_space<vmem>>, %arg5: memref<32x128xbf16, #tpu.memory_space<vmem>>, %arg6: memref<1x128xf32, #tpu.memory_space<vmem>>, %arg7: memref<32x32xbf16, #tpu.memory_space<vmem>>, %arg8: memref<1x32xf32, #tpu.memory_space<vmem>>, %arg9: memref<2x32xf32, #tpu.memory_space<vmem>>) attributes {dimension_semantics = [], scalar_prefetch = 0 : i64, scratch_operands = 0 : i64, tpu.core_type = #tpu.core_type<tc>} {
    %c0 = arith.constant 0 : index
    %c0_0 = arith.constant 0 : index
    %0 = vector.load %arg0[%c0, %c0_0] : memref<16x32xbf16, #tpu.memory_space<vmem>>, vector<16x32xbf16>
    %c0_1 = arith.constant 0 : index
    %c0_2 = arith.constant 0 : index
    %1 = vector.load %arg1[%c0_1, %c0_2] : memref<32x128xbf16, #tpu.memory_space<vmem>>, vector<32x128xbf16>
    %cst = arith.constant dense<0.000000e+00> : vector<16x128xf32>
    %2 = tpu.matmul %0, %1, %cst {dimension_numbers = #tpu.dot_dimension_numbers<[1], [0], [0], [1], [0, 0, 1, 1], [], []>} : vector<16x32xbf16>, vector<32x128xbf16>, vector<16x128xf32> -> vector<16x128xf32>
    %c0_3 = arith.constant 0 : index
    %c0_4 = arith.constant 0 : index
    %3 = vector.load %arg3[%c0_3, %c0_4] : memref<1x128xf32, #tpu.memory_space<vmem>>, vector<1x128xf32>
    %4 = vector.broadcast %3 : vector<1x128xf32> to vector<16x128xf32>
    %5 = arith.addf %2, %4 : vector<16x128xf32>
    %cst_5 = arith.constant 0.000000e+00 : f32
    %6 = vector.broadcast %cst_5 : f32 to vector<2x32xf32>
    %7 = vector.extract_strided_slice %5 {offsets = [0, 0], sizes = [2, 128], strides = [1, 1]} : vector<16x128xf32> to vector<2x128xf32>
    %8 = arith.truncf %6 : vector<2x32xf32> to vector<2x32xbf16>
    %c0_6 = arith.constant 0 : index
    %c0_7 = arith.constant 0 : index
    %9 = vector.load %arg2[%c0_6, %c0_7] : memref<32x128xbf16, #tpu.memory_space<vmem>>, vector<32x128xbf16>
    %cst_8 = arith.constant dense<0.000000e+00> : vector<2x128xf32>
    %10 = tpu.matmul %8, %9, %cst_8 {dimension_numbers = #tpu.dot_dimension_numbers<[1], [0], [0], [1], [0, 0, 1, 1], [], []>} : vector<2x32xbf16>, vector<32x128xbf16>, vector<2x128xf32> -> vector<2x128xf32>
    %11 = arith.addf %7, %10 : vector<2x128xf32>
    %12 = arith.negf %11 : vector<2x128xf32>
    %13 = math.exp %12 : vector<2x128xf32>
    %cst_9 = arith.constant 1.000000e+00 : f32
    %14 = vector.broadcast %cst_9 : f32 to vector<2x128xf32>
    %15 = arith.addf %14, %13 : vector<2x128xf32>
    %16 = arith.divf %14, %15 : vector<2x128xf32>
    %17 = math.tanh %11 : vector<2x128xf32>
    %18 = vector.extract_strided_slice %16 {offsets = [0, 0], sizes = [2, 32], strides = [1, 1]} : vector<2x128xf32> to vector<2x32xf32>
    %19 = vector.extract_strided_slice %16 {offsets = [0, 32], sizes = [2, 32], strides = [1, 1]} : vector<2x128xf32> to vector<2x32xf32>
    %20 = vector.extract_strided_slice %17 {offsets = [0, 64], sizes = [2, 32], strides = [1, 1]} : vector<2x128xf32> to vector<2x32xf32>
    %21 = vector.extract_strided_slice %16 {offsets = [0, 96], sizes = [2, 32], strides = [1, 1]} : vector<2x128xf32> to vector<2x32xf32>
    %22 = arith.mulf %19, %6 : vector<2x32xf32>
    %23 = arith.mulf %18, %20 : vector<2x32xf32>
    %24 = arith.addf %22, %23 : vector<2x32xf32>
    %25 = math.tanh %24 : vector<2x32xf32>
    %26 = arith.mulf %21, %25 : vector<2x32xf32>
    %27 = arith.truncf %26 : vector<2x32xf32> to vector<2x32xbf16>
    %c0_10 = arith.constant 0 : index
    %c0_11 = arith.constant 0 : index
    %28 = vector.load %arg4[%c0_10, %c0_11] : memref<32x128xbf16, #tpu.memory_space<vmem>>, vector<32x128xbf16>
    %cst_12 = arith.constant dense<0.000000e+00> : vector<2x128xf32>
    %29 = tpu.matmul %27, %28, %cst_12 {dimension_numbers = #tpu.dot_dimension_numbers<[1], [0], [0], [1], [0, 0, 1, 1], [], []>} : vector<2x32xbf16>, vector<32x128xbf16>, vector<2x128xf32> -> vector<2x128xf32>
    %c0_13 = arith.constant 0 : index
    %c0_14 = arith.constant 0 : index
    %30 = vector.load %arg6[%c0_13, %c0_14] : memref<1x128xf32, #tpu.memory_space<vmem>>, vector<1x128xf32>
    %31 = vector.broadcast %30 : vector<1x128xf32> to vector<2x128xf32>
    %32 = arith.addf %29, %31 : vector<2x128xf32>
    %33 = vector.extract_strided_slice %5 {offsets = [2, 0], sizes = [2, 128], strides = [1, 1]} : vector<16x128xf32> to vector<2x128xf32>
    %34 = arith.truncf %26 : vector<2x32xf32> to vector<2x32xbf16>
    %c0_15 = arith.constant 0 : index
    %c0_16 = arith.constant 0 : index
    %35 = vector.load %arg2[%c0_15, %c0_16] : memref<32x128xbf16, #tpu.memory_space<vmem>>, vector<32x128xbf16>
    %cst_17 = arith.constant dense<0.000000e+00> : vector<2x128xf32>
    %36 = tpu.matmul %34, %35, %cst_17 {dimension_numbers = #tpu.dot_dimension_numbers<[1], [0], [0], [1], [0, 0, 1, 1], [], []>} : vector<2x32xbf16>, vector<32x128xbf16>, vector<2x128xf32> -> vector<2x128xf32>
    %37 = arith.addf %33, %36 : vector<2x128xf32>
    %38 = arith.negf %37 : vector<2x128xf32>
    %39 = math.exp %38 : vector<2x128xf32>
    %cst_18 = arith.constant 1.000000e+00 : f32
    %40 = vector.broadcast %cst_18 : f32 to vector<2x128xf32>
    %41 = arith.addf %40, %39 : vector<2x128xf32>
    %42 = arith.divf %40, %41 : vector<2x128xf32>
    %43 = math.tanh %37 : vector<2x128xf32>
    %44 = vector.extract_strided_slice %42 {offsets = [0, 0], sizes = [2, 32], strides = [1, 1]} : vector<2x128xf32> to vector<2x32xf32>
    %45 = vector.extract_strided_slice %42 {offsets = [0, 32], sizes = [2, 32], strides = [1, 1]} : vector<2x128xf32> to vector<2x32xf32>
    %46 = vector.extract_strided_slice %43 {offsets = [0, 64], sizes = [2, 32], strides = [1, 1]} : vector<2x128xf32> to vector<2x32xf32>
    %47 = vector.extract_strided_slice %42 {offsets = [0, 96], sizes = [2, 32], strides = [1, 1]} : vector<2x128xf32> to vector<2x32xf32>
    %48 = arith.mulf %45, %24 : vector<2x32xf32>
    %49 = arith.mulf %44, %46 : vector<2x32xf32>
    %50 = arith.addf %48, %49 : vector<2x32xf32>
    %51 = math.tanh %50 : vector<2x32xf32>
    %52 = arith.mulf %47, %51 : vector<2x32xf32>
    %53 = arith.truncf %52 : vector<2x32xf32> to vector<2x32xbf16>
    %c0_19 = arith.constant 0 : index
    %c0_20 = arith.constant 0 : index
    %54 = vector.load %arg4[%c0_19, %c0_20] : memref<32x128xbf16, #tpu.memory_space<vmem>>, vector<32x128xbf16>
    %cst_21 = arith.constant dense<0.000000e+00> : vector<2x128xf32>
    %55 = tpu.matmul %53, %54, %cst_21 {dimension_numbers = #tpu.dot_dimension_numbers<[1], [0], [0], [1], [0, 0, 1, 1], [], []>} : vector<2x32xbf16>, vector<32x128xbf16>, vector<2x128xf32> -> vector<2x128xf32>
    %c0_22 = arith.constant 0 : index
    %c0_23 = arith.constant 0 : index
    %56 = vector.load %arg6[%c0_22, %c0_23] : memref<1x128xf32, #tpu.memory_space<vmem>>, vector<1x128xf32>
    %57 = vector.broadcast %56 : vector<1x128xf32> to vector<2x128xf32>
    %58 = arith.addf %55, %57 : vector<2x128xf32>
    %59 = vector.extract_strided_slice %5 {offsets = [4, 0], sizes = [2, 128], strides = [1, 1]} : vector<16x128xf32> to vector<2x128xf32>
    %60 = arith.truncf %52 : vector<2x32xf32> to vector<2x32xbf16>
    %c0_24 = arith.constant 0 : index
    %c0_25 = arith.constant 0 : index
    %61 = vector.load %arg2[%c0_24, %c0_25] : memref<32x128xbf16, #tpu.memory_space<vmem>>, vector<32x128xbf16>
    %cst_26 = arith.constant dense<0.000000e+00> : vector<2x128xf32>
    %62 = tpu.matmul %60, %61, %cst_26 {dimension_numbers = #tpu.dot_dimension_numbers<[1], [0], [0], [1], [0, 0, 1, 1], [], []>} : vector<2x32xbf16>, vector<32x128xbf16>, vector<2x128xf32> -> vector<2x128xf32>
    %63 = arith.addf %59, %62 : vector<2x128xf32>
    %64 = arith.negf %63 : vector<2x128xf32>
    %65 = math.exp %64 : vector<2x128xf32>
    %cst_27 = arith.constant 1.000000e+00 : f32
    %66 = vector.broadcast %cst_27 : f32 to vector<2x128xf32>
    %67 = arith.addf %66, %65 : vector<2x128xf32>
    %68 = arith.divf %66, %67 : vector<2x128xf32>
    %69 = math.tanh %63 : vector<2x128xf32>
    %70 = vector.extract_strided_slice %68 {offsets = [0, 0], sizes = [2, 32], strides = [1, 1]} : vector<2x128xf32> to vector<2x32xf32>
    %71 = vector.extract_strided_slice %68 {offsets = [0, 32], sizes = [2, 32], strides = [1, 1]} : vector<2x128xf32> to vector<2x32xf32>
    %72 = vector.extract_strided_slice %69 {offsets = [0, 64], sizes = [2, 32], strides = [1, 1]} : vector<2x128xf32> to vector<2x32xf32>
    %73 = vector.extract_strided_slice %68 {offsets = [0, 96], sizes = [2, 32], strides = [1, 1]} : vector<2x128xf32> to vector<2x32xf32>
    %74 = arith.mulf %71, %50 : vector<2x32xf32>
    %75 = arith.mulf %70, %72 : vector<2x32xf32>
    %76 = arith.addf %74, %75 : vector<2x32xf32>
    %77 = math.tanh %76 : vector<2x32xf32>
    %78 = arith.mulf %73, %77 : vector<2x32xf32>
    %79 = arith.truncf %78 : vector<2x32xf32> to vector<2x32xbf16>
    %c0_28 = arith.constant 0 : index
    %c0_29 = arith.constant 0 : index
    %80 = vector.load %arg4[%c0_28, %c0_29] : memref<32x128xbf16, #tpu.memory_space<vmem>>, vector<32x128xbf16>
    %cst_30 = arith.constant dense<0.000000e+00> : vector<2x128xf32>
    %81 = tpu.matmul %79, %80, %cst_30 {dimension_numbers = #tpu.dot_dimension_numbers<[1], [0], [0], [1], [0, 0, 1, 1], [], []>} : vector<2x32xbf16>, vector<32x128xbf16>, vector<2x128xf32> -> vector<2x128xf32>
    %c0_31 = arith.constant 0 : index
    %c0_32 = arith.constant 0 : index
    %82 = vector.load %arg6[%c0_31, %c0_32] : memref<1x128xf32, #tpu.memory_space<vmem>>, vector<1x128xf32>
    %83 = vector.broadcast %82 : vector<1x128xf32> to vector<2x128xf32>
    %84 = arith.addf %81, %83 : vector<2x128xf32>
    %85 = vector.extract_strided_slice %5 {offsets = [6, 0], sizes = [2, 128], strides = [1, 1]} : vector<16x128xf32> to vector<2x128xf32>
    %86 = arith.truncf %78 : vector<2x32xf32> to vector<2x32xbf16>
    %c0_33 = arith.constant 0 : index
    %c0_34 = arith.constant 0 : index
    %87 = vector.load %arg2[%c0_33, %c0_34] : memref<32x128xbf16, #tpu.memory_space<vmem>>, vector<32x128xbf16>
    %cst_35 = arith.constant dense<0.000000e+00> : vector<2x128xf32>
    %88 = tpu.matmul %86, %87, %cst_35 {dimension_numbers = #tpu.dot_dimension_numbers<[1], [0], [0], [1], [0, 0, 1, 1], [], []>} : vector<2x32xbf16>, vector<32x128xbf16>, vector<2x128xf32> -> vector<2x128xf32>
    %89 = arith.addf %85, %88 : vector<2x128xf32>
    %90 = arith.negf %89 : vector<2x128xf32>
    %91 = math.exp %90 : vector<2x128xf32>
    %cst_36 = arith.constant 1.000000e+00 : f32
    %92 = vector.broadcast %cst_36 : f32 to vector<2x128xf32>
    %93 = arith.addf %92, %91 : vector<2x128xf32>
    %94 = arith.divf %92, %93 : vector<2x128xf32>
    %95 = math.tanh %89 : vector<2x128xf32>
    %96 = vector.extract_strided_slice %94 {offsets = [0, 0], sizes = [2, 32], strides = [1, 1]} : vector<2x128xf32> to vector<2x32xf32>
    %97 = vector.extract_strided_slice %94 {offsets = [0, 32], sizes = [2, 32], strides = [1, 1]} : vector<2x128xf32> to vector<2x32xf32>
    %98 = vector.extract_strided_slice %95 {offsets = [0, 64], sizes = [2, 32], strides = [1, 1]} : vector<2x128xf32> to vector<2x32xf32>
    %99 = vector.extract_strided_slice %94 {offsets = [0, 96], sizes = [2, 32], strides = [1, 1]} : vector<2x128xf32> to vector<2x32xf32>
    %100 = arith.mulf %97, %76 : vector<2x32xf32>
    %101 = arith.mulf %96, %98 : vector<2x32xf32>
    %102 = arith.addf %100, %101 : vector<2x32xf32>
    %103 = math.tanh %102 : vector<2x32xf32>
    %104 = arith.mulf %99, %103 : vector<2x32xf32>
    %105 = arith.truncf %104 : vector<2x32xf32> to vector<2x32xbf16>
    %c0_37 = arith.constant 0 : index
    %c0_38 = arith.constant 0 : index
    %106 = vector.load %arg4[%c0_37, %c0_38] : memref<32x128xbf16, #tpu.memory_space<vmem>>, vector<32x128xbf16>
    %cst_39 = arith.constant dense<0.000000e+00> : vector<2x128xf32>
    %107 = tpu.matmul %105, %106, %cst_39 {dimension_numbers = #tpu.dot_dimension_numbers<[1], [0], [0], [1], [0, 0, 1, 1], [], []>} : vector<2x32xbf16>, vector<32x128xbf16>, vector<2x128xf32> -> vector<2x128xf32>
    %c0_40 = arith.constant 0 : index
    %c0_41 = arith.constant 0 : index
    %108 = vector.load %arg6[%c0_40, %c0_41] : memref<1x128xf32, #tpu.memory_space<vmem>>, vector<1x128xf32>
    %109 = vector.broadcast %108 : vector<1x128xf32> to vector<2x128xf32>
    %110 = arith.addf %107, %109 : vector<2x128xf32>
    %111 = vector.extract_strided_slice %5 {offsets = [8, 0], sizes = [2, 128], strides = [1, 1]} : vector<16x128xf32> to vector<2x128xf32>
    %112 = arith.truncf %104 : vector<2x32xf32> to vector<2x32xbf16>
    %c0_42 = arith.constant 0 : index
    %c0_43 = arith.constant 0 : index
    %113 = vector.load %arg2[%c0_42, %c0_43] : memref<32x128xbf16, #tpu.memory_space<vmem>>, vector<32x128xbf16>
    %cst_44 = arith.constant dense<0.000000e+00> : vector<2x128xf32>
    %114 = tpu.matmul %112, %113, %cst_44 {dimension_numbers = #tpu.dot_dimension_numbers<[1], [0], [0], [1], [0, 0, 1, 1], [], []>} : vector<2x32xbf16>, vector<32x128xbf16>, vector<2x128xf32> -> vector<2x128xf32>
    %115 = arith.addf %111, %114 : vector<2x128xf32>
    %116 = arith.negf %115 : vector<2x128xf32>
    %117 = math.exp %116 : vector<2x128xf32>
    %cst_45 = arith.constant 1.000000e+00 : f32
    %118 = vector.broadcast %cst_45 : f32 to vector<2x128xf32>
    %119 = arith.addf %118, %117 : vector<2x128xf32>
    %120 = arith.divf %118, %119 : vector<2x128xf32>
    %121 = math.tanh %115 : vector<2x128xf32>
    %122 = vector.extract_strided_slice %120 {offsets = [0, 0], sizes = [2, 32], strides = [1, 1]} : vector<2x128xf32> to vector<2x32xf32>
    %123 = vector.extract_strided_slice %120 {offsets = [0, 32], sizes = [2, 32], strides = [1, 1]} : vector<2x128xf32> to vector<2x32xf32>
    %124 = vector.extract_strided_slice %121 {offsets = [0, 64], sizes = [2, 32], strides = [1, 1]} : vector<2x128xf32> to vector<2x32xf32>
    %125 = vector.extract_strided_slice %120 {offsets = [0, 96], sizes = [2, 32], strides = [1, 1]} : vector<2x128xf32> to vector<2x32xf32>
    %126 = arith.mulf %123, %102 : vector<2x32xf32>
    %127 = arith.mulf %122, %124 : vector<2x32xf32>
    %128 = arith.addf %126, %127 : vector<2x32xf32>
    %129 = math.tanh %128 : vector<2x32xf32>
    %130 = arith.mulf %125, %129 : vector<2x32xf32>
    %131 = arith.truncf %130 : vector<2x32xf32> to vector<2x32xbf16>
    %c0_46 = arith.constant 0 : index
    %c0_47 = arith.constant 0 : index
    %132 = vector.load %arg4[%c0_46, %c0_47] : memref<32x128xbf16, #tpu.memory_space<vmem>>, vector<32x128xbf16>
    %cst_48 = arith.constant dense<0.000000e+00> : vector<2x128xf32>
    %133 = tpu.matmul %131, %132, %cst_48 {dimension_numbers = #tpu.dot_dimension_numbers<[1], [0], [0], [1], [0, 0, 1, 1], [], []>} : vector<2x32xbf16>, vector<32x128xbf16>, vector<2x128xf32> -> vector<2x128xf32>
    %c0_49 = arith.constant 0 : index
    %c0_50 = arith.constant 0 : index
    %134 = vector.load %arg6[%c0_49, %c0_50] : memref<1x128xf32, #tpu.memory_space<vmem>>, vector<1x128xf32>
    %135 = vector.broadcast %134 : vector<1x128xf32> to vector<2x128xf32>
    %136 = arith.addf %133, %135 : vector<2x128xf32>
    %137 = vector.extract_strided_slice %5 {offsets = [10, 0], sizes = [2, 128], strides = [1, 1]} : vector<16x128xf32> to vector<2x128xf32>
    %138 = arith.truncf %130 : vector<2x32xf32> to vector<2x32xbf16>
    %c0_51 = arith.constant 0 : index
    %c0_52 = arith.constant 0 : index
    %139 = vector.load %arg2[%c0_51, %c0_52] : memref<32x128xbf16, #tpu.memory_space<vmem>>, vector<32x128xbf16>
    %cst_53 = arith.constant dense<0.000000e+00> : vector<2x128xf32>
    %140 = tpu.matmul %138, %139, %cst_53 {dimension_numbers = #tpu.dot_dimension_numbers<[1], [0], [0], [1], [0, 0, 1, 1], [], []>} : vector<2x32xbf16>, vector<32x128xbf16>, vector<2x128xf32> -> vector<2x128xf32>
    %141 = arith.addf %137, %140 : vector<2x128xf32>
    %142 = arith.negf %141 : vector<2x128xf32>
    %143 = math.exp %142 : vector<2x128xf32>
    %cst_54 = arith.constant 1.000000e+00 : f32
    %144 = vector.broadcast %cst_54 : f32 to vector<2x128xf32>
    %145 = arith.addf %144, %143 : vector<2x128xf32>
    %146 = arith.divf %144, %145 : vector<2x128xf32>
    %147 = math.tanh %141 : vector<2x128xf32>
    %148 = vector.extract_strided_slice %146 {offsets = [0, 0], sizes = [2, 32], strides = [1, 1]} : vector<2x128xf32> to vector<2x32xf32>
    %149 = vector.extract_strided_slice %146 {offsets = [0, 32], sizes = [2, 32], strides = [1, 1]} : vector<2x128xf32> to vector<2x32xf32>
    %150 = vector.extract_strided_slice %147 {offsets = [0, 64], sizes = [2, 32], strides = [1, 1]} : vector<2x128xf32> to vector<2x32xf32>
    %151 = vector.extract_strided_slice %146 {offsets = [0, 96], sizes = [2, 32], strides = [1, 1]} : vector<2x128xf32> to vector<2x32xf32>
    %152 = arith.mulf %149, %128 : vector<2x32xf32>
    %153 = arith.mulf %148, %150 : vector<2x32xf32>
    %154 = arith.addf %152, %153 : vector<2x32xf32>
    %155 = math.tanh %154 : vector<2x32xf32>
    %156 = arith.mulf %151, %155 : vector<2x32xf32>
    %157 = arith.truncf %156 : vector<2x32xf32> to vector<2x32xbf16>
    %c0_55 = arith.constant 0 : index
    %c0_56 = arith.constant 0 : index
    %158 = vector.load %arg4[%c0_55, %c0_56] : memref<32x128xbf16, #tpu.memory_space<vmem>>, vector<32x128xbf16>
    %cst_57 = arith.constant dense<0.000000e+00> : vector<2x128xf32>
    %159 = tpu.matmul %157, %158, %cst_57 {dimension_numbers = #tpu.dot_dimension_numbers<[1], [0], [0], [1], [0, 0, 1, 1], [], []>} : vector<2x32xbf16>, vector<32x128xbf16>, vector<2x128xf32> -> vector<2x128xf32>
    %c0_58 = arith.constant 0 : index
    %c0_59 = arith.constant 0 : index
    %160 = vector.load %arg6[%c0_58, %c0_59] : memref<1x128xf32, #tpu.memory_space<vmem>>, vector<1x128xf32>
    %161 = vector.broadcast %160 : vector<1x128xf32> to vector<2x128xf32>
    %162 = arith.addf %159, %161 : vector<2x128xf32>
    %163 = vector.extract_strided_slice %5 {offsets = [12, 0], sizes = [2, 128], strides = [1, 1]} : vector<16x128xf32> to vector<2x128xf32>
    %164 = arith.truncf %156 : vector<2x32xf32> to vector<2x32xbf16>
    %c0_60 = arith.constant 0 : index
    %c0_61 = arith.constant 0 : index
    %165 = vector.load %arg2[%c0_60, %c0_61] : memref<32x128xbf16, #tpu.memory_space<vmem>>, vector<32x128xbf16>
    %cst_62 = arith.constant dense<0.000000e+00> : vector<2x128xf32>
    %166 = tpu.matmul %164, %165, %cst_62 {dimension_numbers = #tpu.dot_dimension_numbers<[1], [0], [0], [1], [0, 0, 1, 1], [], []>} : vector<2x32xbf16>, vector<32x128xbf16>, vector<2x128xf32> -> vector<2x128xf32>
    %167 = arith.addf %163, %166 : vector<2x128xf32>
    %168 = arith.negf %167 : vector<2x128xf32>
    %169 = math.exp %168 : vector<2x128xf32>
    %cst_63 = arith.constant 1.000000e+00 : f32
    %170 = vector.broadcast %cst_63 : f32 to vector<2x128xf32>
    %171 = arith.addf %170, %169 : vector<2x128xf32>
    %172 = arith.divf %170, %171 : vector<2x128xf32>
    %173 = math.tanh %167 : vector<2x128xf32>
    %174 = vector.extract_strided_slice %172 {offsets = [0, 0], sizes = [2, 32], strides = [1, 1]} : vector<2x128xf32> to vector<2x32xf32>
    %175 = vector.extract_strided_slice %172 {offsets = [0, 32], sizes = [2, 32], strides = [1, 1]} : vector<2x128xf32> to vector<2x32xf32>
    %176 = vector.extract_strided_slice %173 {offsets = [0, 64], sizes = [2, 32], strides = [1, 1]} : vector<2x128xf32> to vector<2x32xf32>
    %177 = vector.extract_strided_slice %172 {offsets = [0, 96], sizes = [2, 32], strides = [1, 1]} : vector<2x128xf32> to vector<2x32xf32>
    %178 = arith.mulf %175, %154 : vector<2x32xf32>
    %179 = arith.mulf %174, %176 : vector<2x32xf32>
    %180 = arith.addf %178, %179 : vector<2x32xf32>
    %181 = math.tanh %180 : vector<2x32xf32>
    %182 = arith.mulf %177, %181 : vector<2x32xf32>
    %183 = arith.truncf %182 : vector<2x32xf32> to vector<2x32xbf16>
    %c0_64 = arith.constant 0 : index
    %c0_65 = arith.constant 0 : index
    %184 = vector.load %arg4[%c0_64, %c0_65] : memref<32x128xbf16, #tpu.memory_space<vmem>>, vector<32x128xbf16>
    %cst_66 = arith.constant dense<0.000000e+00> : vector<2x128xf32>
    %185 = tpu.matmul %183, %184, %cst_66 {dimension_numbers = #tpu.dot_dimension_numbers<[1], [0], [0], [1], [0, 0, 1, 1], [], []>} : vector<2x32xbf16>, vector<32x128xbf16>, vector<2x128xf32> -> vector<2x128xf32>
    %c0_67 = arith.constant 0 : index
    %c0_68 = arith.constant 0 : index
    %186 = vector.load %arg6[%c0_67, %c0_68] : memref<1x128xf32, #tpu.memory_space<vmem>>, vector<1x128xf32>
    %187 = vector.broadcast %186 : vector<1x128xf32> to vector<2x128xf32>
    %188 = arith.addf %185, %187 : vector<2x128xf32>
    %189 = vector.extract_strided_slice %5 {offsets = [14, 0], sizes = [2, 128], strides = [1, 1]} : vector<16x128xf32> to vector<2x128xf32>
    %190 = arith.truncf %182 : vector<2x32xf32> to vector<2x32xbf16>
    %c0_69 = arith.constant 0 : index
    %c0_70 = arith.constant 0 : index
    %191 = vector.load %arg2[%c0_69, %c0_70] : memref<32x128xbf16, #tpu.memory_space<vmem>>, vector<32x128xbf16>
    %cst_71 = arith.constant dense<0.000000e+00> : vector<2x128xf32>
    %192 = tpu.matmul %190, %191, %cst_71 {dimension_numbers = #tpu.dot_dimension_numbers<[1], [0], [0], [1], [0, 0, 1, 1], [], []>} : vector<2x32xbf16>, vector<32x128xbf16>, vector<2x128xf32> -> vector<2x128xf32>
    %193 = arith.addf %189, %192 : vector<2x128xf32>
    %194 = arith.negf %193 : vector<2x128xf32>
    %195 = math.exp %194 : vector<2x128xf32>
    %cst_72 = arith.constant 1.000000e+00 : f32
    %196 = vector.broadcast %cst_72 : f32 to vector<2x128xf32>
    %197 = arith.addf %196, %195 : vector<2x128xf32>
    %198 = arith.divf %196, %197 : vector<2x128xf32>
    %199 = math.tanh %193 : vector<2x128xf32>
    %200 = vector.extract_strided_slice %198 {offsets = [0, 0], sizes = [2, 32], strides = [1, 1]} : vector<2x128xf32> to vector<2x32xf32>
    %201 = vector.extract_strided_slice %198 {offsets = [0, 32], sizes = [2, 32], strides = [1, 1]} : vector<2x128xf32> to vector<2x32xf32>
    %202 = vector.extract_strided_slice %199 {offsets = [0, 64], sizes = [2, 32], strides = [1, 1]} : vector<2x128xf32> to vector<2x32xf32>
    %203 = vector.extract_strided_slice %198 {offsets = [0, 96], sizes = [2, 32], strides = [1, 1]} : vector<2x128xf32> to vector<2x32xf32>
    %204 = arith.mulf %201, %180 : vector<2x32xf32>
    %205 = arith.mulf %200, %202 : vector<2x32xf32>
    %206 = arith.addf %204, %205 : vector<2x32xf32>
    %207 = math.tanh %206 : vector<2x32xf32>
    %208 = arith.mulf %203, %207 : vector<2x32xf32>
    %209 = arith.truncf %208 : vector<2x32xf32> to vector<2x32xbf16>
    %c0_73 = arith.constant 0 : index
    %c0_74 = arith.constant 0 : index
    %210 = vector.load %arg4[%c0_73, %c0_74] : memref<32x128xbf16, #tpu.memory_space<vmem>>, vector<32x128xbf16>
    %cst_75 = arith.constant dense<0.000000e+00> : vector<2x128xf32>
    %211 = tpu.matmul %209, %210, %cst_75 {dimension_numbers = #tpu.dot_dimension_numbers<[1], [0], [0], [1], [0, 0, 1, 1], [], []>} : vector<2x32xbf16>, vector<32x128xbf16>, vector<2x128xf32> -> vector<2x128xf32>
    %c0_76 = arith.constant 0 : index
    %c0_77 = arith.constant 0 : index
    %212 = vector.load %arg6[%c0_76, %c0_77] : memref<1x128xf32, #tpu.memory_space<vmem>>, vector<1x128xf32>
    %213 = vector.broadcast %212 : vector<1x128xf32> to vector<2x128xf32>
    %214 = arith.addf %211, %213 : vector<2x128xf32>
    %215 = arith.truncf %6 : vector<2x32xf32> to vector<2x32xbf16>
    %c0_78 = arith.constant 0 : index
    %c0_79 = arith.constant 0 : index
    %216 = vector.load %arg5[%c0_78, %c0_79] : memref<32x128xbf16, #tpu.memory_space<vmem>>, vector<32x128xbf16>
    %cst_80 = arith.constant dense<0.000000e+00> : vector<2x128xf32>
    %217 = tpu.matmul %215, %216, %cst_80 {dimension_numbers = #tpu.dot_dimension_numbers<[1], [0], [0], [1], [0, 0, 1, 1], [], []>} : vector<2x32xbf16>, vector<32x128xbf16>, vector<2x128xf32> -> vector<2x128xf32>
    %218 = arith.addf %32, %217 : vector<2x128xf32>
    %219 = arith.negf %218 : vector<2x128xf32>
    %220 = math.exp %219 : vector<2x128xf32>
    %cst_81 = arith.constant 1.000000e+00 : f32
    %221 = vector.broadcast %cst_81 : f32 to vector<2x128xf32>
    %222 = arith.addf %221, %220 : vector<2x128xf32>
    %223 = arith.divf %221, %222 : vector<2x128xf32>
    %224 = math.tanh %218 : vector<2x128xf32>
    %225 = vector.extract_strided_slice %223 {offsets = [0, 0], sizes = [2, 32], strides = [1, 1]} : vector<2x128xf32> to vector<2x32xf32>
    %226 = vector.extract_strided_slice %223 {offsets = [0, 32], sizes = [2, 32], strides = [1, 1]} : vector<2x128xf32> to vector<2x32xf32>
    %227 = vector.extract_strided_slice %224 {offsets = [0, 64], sizes = [2, 32], strides = [1, 1]} : vector<2x128xf32> to vector<2x32xf32>
    %228 = vector.extract_strided_slice %223 {offsets = [0, 96], sizes = [2, 32], strides = [1, 1]} : vector<2x128xf32> to vector<2x32xf32>
    %229 = arith.mulf %226, %6 : vector<2x32xf32>
    %230 = arith.mulf %225, %227 : vector<2x32xf32>
    %231 = arith.addf %229, %230 : vector<2x32xf32>
    %232 = math.tanh %231 : vector<2x32xf32>
    %233 = arith.mulf %228, %232 : vector<2x32xf32>
    %234 = arith.truncf %233 : vector<2x32xf32> to vector<2x32xbf16>
    %c0_82 = arith.constant 0 : index
    %c0_83 = arith.constant 0 : index
    %235 = vector.load %arg5[%c0_82, %c0_83] : memref<32x128xbf16, #tpu.memory_space<vmem>>, vector<32x128xbf16>
    %cst_84 = arith.constant dense<0.000000e+00> : vector<2x128xf32>
    %236 = tpu.matmul %234, %235, %cst_84 {dimension_numbers = #tpu.dot_dimension_numbers<[1], [0], [0], [1], [0, 0, 1, 1], [], []>} : vector<2x32xbf16>, vector<32x128xbf16>, vector<2x128xf32> -> vector<2x128xf32>
    %237 = arith.addf %58, %236 : vector<2x128xf32>
    %238 = arith.negf %237 : vector<2x128xf32>
    %239 = math.exp %238 : vector<2x128xf32>
    %cst_85 = arith.constant 1.000000e+00 : f32
    %240 = vector.broadcast %cst_85 : f32 to vector<2x128xf32>
    %241 = arith.addf %240, %239 : vector<2x128xf32>
    %242 = arith.divf %240, %241 : vector<2x128xf32>
    %243 = math.tanh %237 : vector<2x128xf32>
    %244 = vector.extract_strided_slice %242 {offsets = [0, 0], sizes = [2, 32], strides = [1, 1]} : vector<2x128xf32> to vector<2x32xf32>
    %245 = vector.extract_strided_slice %242 {offsets = [0, 32], sizes = [2, 32], strides = [1, 1]} : vector<2x128xf32> to vector<2x32xf32>
    %246 = vector.extract_strided_slice %243 {offsets = [0, 64], sizes = [2, 32], strides = [1, 1]} : vector<2x128xf32> to vector<2x32xf32>
    %247 = vector.extract_strided_slice %242 {offsets = [0, 96], sizes = [2, 32], strides = [1, 1]} : vector<2x128xf32> to vector<2x32xf32>
    %248 = arith.mulf %245, %231 : vector<2x32xf32>
    %249 = arith.mulf %244, %246 : vector<2x32xf32>
    %250 = arith.addf %248, %249 : vector<2x32xf32>
    %251 = math.tanh %250 : vector<2x32xf32>
    %252 = arith.mulf %247, %251 : vector<2x32xf32>
    %253 = arith.truncf %252 : vector<2x32xf32> to vector<2x32xbf16>
    %c0_86 = arith.constant 0 : index
    %c0_87 = arith.constant 0 : index
    %254 = vector.load %arg5[%c0_86, %c0_87] : memref<32x128xbf16, #tpu.memory_space<vmem>>, vector<32x128xbf16>
    %cst_88 = arith.constant dense<0.000000e+00> : vector<2x128xf32>
    %255 = tpu.matmul %253, %254, %cst_88 {dimension_numbers = #tpu.dot_dimension_numbers<[1], [0], [0], [1], [0, 0, 1, 1], [], []>} : vector<2x32xbf16>, vector<32x128xbf16>, vector<2x128xf32> -> vector<2x128xf32>
    %256 = arith.addf %84, %255 : vector<2x128xf32>
    %257 = arith.negf %256 : vector<2x128xf32>
    %258 = math.exp %257 : vector<2x128xf32>
    %cst_89 = arith.constant 1.000000e+00 : f32
    %259 = vector.broadcast %cst_89 : f32 to vector<2x128xf32>
    %260 = arith.addf %259, %258 : vector<2x128xf32>
    %261 = arith.divf %259, %260 : vector<2x128xf32>
    %262 = math.tanh %256 : vector<2x128xf32>
    %263 = vector.extract_strided_slice %261 {offsets = [0, 0], sizes = [2, 32], strides = [1, 1]} : vector<2x128xf32> to vector<2x32xf32>
    %264 = vector.extract_strided_slice %261 {offsets = [0, 32], sizes = [2, 32], strides = [1, 1]} : vector<2x128xf32> to vector<2x32xf32>
    %265 = vector.extract_strided_slice %262 {offsets = [0, 64], sizes = [2, 32], strides = [1, 1]} : vector<2x128xf32> to vector<2x32xf32>
    %266 = vector.extract_strided_slice %261 {offsets = [0, 96], sizes = [2, 32], strides = [1, 1]} : vector<2x128xf32> to vector<2x32xf32>
    %267 = arith.mulf %264, %250 : vector<2x32xf32>
    %268 = arith.mulf %263, %265 : vector<2x32xf32>
    %269 = arith.addf %267, %268 : vector<2x32xf32>
    %270 = math.tanh %269 : vector<2x32xf32>
    %271 = arith.mulf %266, %270 : vector<2x32xf32>
    %272 = arith.truncf %271 : vector<2x32xf32> to vector<2x32xbf16>
    %c0_90 = arith.constant 0 : index
    %c0_91 = arith.constant 0 : index
    %273 = vector.load %arg5[%c0_90, %c0_91] : memref<32x128xbf16, #tpu.memory_space<vmem>>, vector<32x128xbf16>
    %cst_92 = arith.constant dense<0.000000e+00> : vector<2x128xf32>
    %274 = tpu.matmul %272, %273, %cst_92 {dimension_numbers = #tpu.dot_dimension_numbers<[1], [0], [0], [1], [0, 0, 1, 1], [], []>} : vector<2x32xbf16>, vector<32x128xbf16>, vector<2x128xf32> -> vector<2x128xf32>
    %275 = arith.addf %110, %274 : vector<2x128xf32>
    %276 = arith.negf %275 : vector<2x128xf32>
    %277 = math.exp %276 : vector<2x128xf32>
    %cst_93 = arith.constant 1.000000e+00 : f32
    %278 = vector.broadcast %cst_93 : f32 to vector<2x128xf32>
    %279 = arith.addf %278, %277 : vector<2x128xf32>
    %280 = arith.divf %278, %279 : vector<2x128xf32>
    %281 = math.tanh %275 : vector<2x128xf32>
    %282 = vector.extract_strided_slice %280 {offsets = [0, 0], sizes = [2, 32], strides = [1, 1]} : vector<2x128xf32> to vector<2x32xf32>
    %283 = vector.extract_strided_slice %280 {offsets = [0, 32], sizes = [2, 32], strides = [1, 1]} : vector<2x128xf32> to vector<2x32xf32>
    %284 = vector.extract_strided_slice %281 {offsets = [0, 64], sizes = [2, 32], strides = [1, 1]} : vector<2x128xf32> to vector<2x32xf32>
    %285 = vector.extract_strided_slice %280 {offsets = [0, 96], sizes = [2, 32], strides = [1, 1]} : vector<2x128xf32> to vector<2x32xf32>
    %286 = arith.mulf %283, %269 : vector<2x32xf32>
    %287 = arith.mulf %282, %284 : vector<2x32xf32>
    %288 = arith.addf %286, %287 : vector<2x32xf32>
    %289 = math.tanh %288 : vector<2x32xf32>
    %290 = arith.mulf %285, %289 : vector<2x32xf32>
    %291 = arith.truncf %290 : vector<2x32xf32> to vector<2x32xbf16>
    %c0_94 = arith.constant 0 : index
    %c0_95 = arith.constant 0 : index
    %292 = vector.load %arg5[%c0_94, %c0_95] : memref<32x128xbf16, #tpu.memory_space<vmem>>, vector<32x128xbf16>
    %cst_96 = arith.constant dense<0.000000e+00> : vector<2x128xf32>
    %293 = tpu.matmul %291, %292, %cst_96 {dimension_numbers = #tpu.dot_dimension_numbers<[1], [0], [0], [1], [0, 0, 1, 1], [], []>} : vector<2x32xbf16>, vector<32x128xbf16>, vector<2x128xf32> -> vector<2x128xf32>
    %294 = arith.addf %136, %293 : vector<2x128xf32>
    %295 = arith.negf %294 : vector<2x128xf32>
    %296 = math.exp %295 : vector<2x128xf32>
    %cst_97 = arith.constant 1.000000e+00 : f32
    %297 = vector.broadcast %cst_97 : f32 to vector<2x128xf32>
    %298 = arith.addf %297, %296 : vector<2x128xf32>
    %299 = arith.divf %297, %298 : vector<2x128xf32>
    %300 = math.tanh %294 : vector<2x128xf32>
    %301 = vector.extract_strided_slice %299 {offsets = [0, 0], sizes = [2, 32], strides = [1, 1]} : vector<2x128xf32> to vector<2x32xf32>
    %302 = vector.extract_strided_slice %299 {offsets = [0, 32], sizes = [2, 32], strides = [1, 1]} : vector<2x128xf32> to vector<2x32xf32>
    %303 = vector.extract_strided_slice %300 {offsets = [0, 64], sizes = [2, 32], strides = [1, 1]} : vector<2x128xf32> to vector<2x32xf32>
    %304 = vector.extract_strided_slice %299 {offsets = [0, 96], sizes = [2, 32], strides = [1, 1]} : vector<2x128xf32> to vector<2x32xf32>
    %305 = arith.mulf %302, %288 : vector<2x32xf32>
    %306 = arith.mulf %301, %303 : vector<2x32xf32>
    %307 = arith.addf %305, %306 : vector<2x32xf32>
    %308 = math.tanh %307 : vector<2x32xf32>
    %309 = arith.mulf %304, %308 : vector<2x32xf32>
    %310 = arith.truncf %309 : vector<2x32xf32> to vector<2x32xbf16>
    %c0_98 = arith.constant 0 : index
    %c0_99 = arith.constant 0 : index
    %311 = vector.load %arg5[%c0_98, %c0_99] : memref<32x128xbf16, #tpu.memory_space<vmem>>, vector<32x128xbf16>
    %cst_100 = arith.constant dense<0.000000e+00> : vector<2x128xf32>
    %312 = tpu.matmul %310, %311, %cst_100 {dimension_numbers = #tpu.dot_dimension_numbers<[1], [0], [0], [1], [0, 0, 1, 1], [], []>} : vector<2x32xbf16>, vector<32x128xbf16>, vector<2x128xf32> -> vector<2x128xf32>
    %313 = arith.addf %162, %312 : vector<2x128xf32>
    %314 = arith.negf %313 : vector<2x128xf32>
    %315 = math.exp %314 : vector<2x128xf32>
    %cst_101 = arith.constant 1.000000e+00 : f32
    %316 = vector.broadcast %cst_101 : f32 to vector<2x128xf32>
    %317 = arith.addf %316, %315 : vector<2x128xf32>
    %318 = arith.divf %316, %317 : vector<2x128xf32>
    %319 = math.tanh %313 : vector<2x128xf32>
    %320 = vector.extract_strided_slice %318 {offsets = [0, 0], sizes = [2, 32], strides = [1, 1]} : vector<2x128xf32> to vector<2x32xf32>
    %321 = vector.extract_strided_slice %318 {offsets = [0, 32], sizes = [2, 32], strides = [1, 1]} : vector<2x128xf32> to vector<2x32xf32>
    %322 = vector.extract_strided_slice %319 {offsets = [0, 64], sizes = [2, 32], strides = [1, 1]} : vector<2x128xf32> to vector<2x32xf32>
    %323 = vector.extract_strided_slice %318 {offsets = [0, 96], sizes = [2, 32], strides = [1, 1]} : vector<2x128xf32> to vector<2x32xf32>
    %324 = arith.mulf %321, %307 : vector<2x32xf32>
    %325 = arith.mulf %320, %322 : vector<2x32xf32>
    %326 = arith.addf %324, %325 : vector<2x32xf32>
    %327 = math.tanh %326 : vector<2x32xf32>
    %328 = arith.mulf %323, %327 : vector<2x32xf32>
    %329 = arith.truncf %328 : vector<2x32xf32> to vector<2x32xbf16>
    %c0_102 = arith.constant 0 : index
    %c0_103 = arith.constant 0 : index
    %330 = vector.load %arg5[%c0_102, %c0_103] : memref<32x128xbf16, #tpu.memory_space<vmem>>, vector<32x128xbf16>
    %cst_104 = arith.constant dense<0.000000e+00> : vector<2x128xf32>
    %331 = tpu.matmul %329, %330, %cst_104 {dimension_numbers = #tpu.dot_dimension_numbers<[1], [0], [0], [1], [0, 0, 1, 1], [], []>} : vector<2x32xbf16>, vector<32x128xbf16>, vector<2x128xf32> -> vector<2x128xf32>
    %332 = arith.addf %188, %331 : vector<2x128xf32>
    %333 = arith.negf %332 : vector<2x128xf32>
    %334 = math.exp %333 : vector<2x128xf32>
    %cst_105 = arith.constant 1.000000e+00 : f32
    %335 = vector.broadcast %cst_105 : f32 to vector<2x128xf32>
    %336 = arith.addf %335, %334 : vector<2x128xf32>
    %337 = arith.divf %335, %336 : vector<2x128xf32>
    %338 = math.tanh %332 : vector<2x128xf32>
    %339 = vector.extract_strided_slice %337 {offsets = [0, 0], sizes = [2, 32], strides = [1, 1]} : vector<2x128xf32> to vector<2x32xf32>
    %340 = vector.extract_strided_slice %337 {offsets = [0, 32], sizes = [2, 32], strides = [1, 1]} : vector<2x128xf32> to vector<2x32xf32>
    %341 = vector.extract_strided_slice %338 {offsets = [0, 64], sizes = [2, 32], strides = [1, 1]} : vector<2x128xf32> to vector<2x32xf32>
    %342 = vector.extract_strided_slice %337 {offsets = [0, 96], sizes = [2, 32], strides = [1, 1]} : vector<2x128xf32> to vector<2x32xf32>
    %343 = arith.mulf %340, %326 : vector<2x32xf32>
    %344 = arith.mulf %339, %341 : vector<2x32xf32>
    %345 = arith.addf %343, %344 : vector<2x32xf32>
    %346 = math.tanh %345 : vector<2x32xf32>
    %347 = arith.mulf %342, %346 : vector<2x32xf32>
    %348 = arith.truncf %347 : vector<2x32xf32> to vector<2x32xbf16>
    %c0_106 = arith.constant 0 : index
    %c0_107 = arith.constant 0 : index
    %349 = vector.load %arg5[%c0_106, %c0_107] : memref<32x128xbf16, #tpu.memory_space<vmem>>, vector<32x128xbf16>
    %cst_108 = arith.constant dense<0.000000e+00> : vector<2x128xf32>
    %350 = tpu.matmul %348, %349, %cst_108 {dimension_numbers = #tpu.dot_dimension_numbers<[1], [0], [0], [1], [0, 0, 1, 1], [], []>} : vector<2x32xbf16>, vector<32x128xbf16>, vector<2x128xf32> -> vector<2x128xf32>
    %351 = arith.addf %214, %350 : vector<2x128xf32>
    %352 = arith.negf %351 : vector<2x128xf32>
    %353 = math.exp %352 : vector<2x128xf32>
    %cst_109 = arith.constant 1.000000e+00 : f32
    %354 = vector.broadcast %cst_109 : f32 to vector<2x128xf32>
    %355 = arith.addf %354, %353 : vector<2x128xf32>
    %356 = arith.divf %354, %355 : vector<2x128xf32>
    %357 = math.tanh %351 : vector<2x128xf32>
    %358 = vector.extract_strided_slice %356 {offsets = [0, 0], sizes = [2, 32], strides = [1, 1]} : vector<2x128xf32> to vector<2x32xf32>
    %359 = vector.extract_strided_slice %356 {offsets = [0, 32], sizes = [2, 32], strides = [1, 1]} : vector<2x128xf32> to vector<2x32xf32>
    %360 = vector.extract_strided_slice %357 {offsets = [0, 64], sizes = [2, 32], strides = [1, 1]} : vector<2x128xf32> to vector<2x32xf32>
    %361 = vector.extract_strided_slice %356 {offsets = [0, 96], sizes = [2, 32], strides = [1, 1]} : vector<2x128xf32> to vector<2x32xf32>
    %362 = arith.mulf %359, %345 : vector<2x32xf32>
    %363 = arith.mulf %358, %360 : vector<2x32xf32>
    %364 = arith.addf %362, %363 : vector<2x32xf32>
    %365 = math.tanh %364 : vector<2x32xf32>
    %366 = arith.mulf %361, %365 : vector<2x32xf32>
    %367 = arith.truncf %366 : vector<2x32xf32> to vector<2x32xbf16>
    %c0_110 = arith.constant 0 : index
    %c0_111 = arith.constant 0 : index
    %368 = vector.load %arg7[%c0_110, %c0_111] : memref<32x32xbf16, #tpu.memory_space<vmem>>, vector<32x32xbf16>
    %cst_112 = arith.constant dense<0.000000e+00> : vector<2x32xf32>
    %369 = tpu.matmul %367, %368, %cst_112 {dimension_numbers = #tpu.dot_dimension_numbers<[1], [0], [0], [1], [0, 0, 1, 1], [], []>} : vector<2x32xbf16>, vector<32x32xbf16>, vector<2x32xf32> -> vector<2x32xf32>
    %c0_113 = arith.constant 0 : index
    %c0_114 = arith.constant 0 : index
    %370 = vector.load %arg8[%c0_113, %c0_114] : memref<1x32xf32, #tpu.memory_space<vmem>>, vector<1x32xf32>
    %371 = vector.broadcast %370 : vector<1x32xf32> to vector<2x32xf32>
    %372 = arith.addf %369, %371 : vector<2x32xf32>
    %cst_115 = arith.constant 0.000000e+00 : f32
    %373 = vector.broadcast %cst_115 : f32 to vector<2x32xf32>
    %374 = arith.maximumf %372, %373 : vector<2x32xf32>
    %c0_116 = arith.constant 0 : index
    %c0_117 = arith.constant 0 : index
    %375 = vector.load %arg9[%c0_116, %c0_117] : memref<2x32xf32, #tpu.memory_space<vmem>>, vector<2x32xf32>
    tpu.vector_store %arg9[%c0_116, %c0_117], %374 {strides = array<i32>} : memref<2x32xf32, #tpu.memory_space<vmem>>, vector<2x32xf32>,
    return
  }
}

</mosaic_0001>

<llo_original>
// kernel: tpu_custom_call.1
$region0: #{tpu_custom_call.1}
  #allocation0 [shape = 'u32[]', space=smem, size = 0x4, offset = 0x4, fixed_abs, tag = 'smem constant byte address 0x4 - core index']
  #allocation1 [shape = 'u32[144,128]{1,0:T(1,128)}', space=vmem, size = 0x12000, scoped, tag = 'internal scratch']
  %s0 = inlined_call_operand.hbm [shape: bf16[16,32], index: 0, kind: input, shape index: {}]
  %s1 = inlined_call_operand.hbm [shape: bf16[32,128], index: 1, kind: input, shape index: {}]
  %s2 = inlined_call_operand.hbm [shape: bf16[32,128], index: 2, kind: input, shape index: {}]
  %s3 = inlined_call_operand.vmem [shape: f32[1,128], index: 3, kind: input, shape index: {}]
  %s4 = inlined_call_operand.hbm [shape: bf16[32,128], index: 4, kind: input, shape index: {}]
  %s5 = inlined_call_operand.vmem [shape: bf16[32,128], index: 5, kind: input, shape index: {}]
  %s6 = inlined_call_operand.vmem [shape: f32[1,128], index: 6, kind: input, shape index: {}]
  %s7 = inlined_call_operand.hbm [shape: bf16[32,32], index: 7, kind: input, shape index: {}]
  %s8 = inlined_call_operand.vmem [shape: f32[1,32], index: 8, kind: input, shape index: {}]
  %s9 = inlined_call_operand.hbm [shape: f32[2,32], index: 9, kind: output, shape index: {}]
  %s10 = sld [smem:[#allocation0]]
  $region66: #{tpu_custom_call.1} parent=0
    _
  %s12 = ssub.s32 1, %s10
  %s13 = scalar_select 0, %s12, %s10
  $region1: #{tpu_custom_call.1} parent=0
    #allocation2 [shape = 'u8[4096]{0}', space=vmem, size = 0x1000, scoped, tag = 'input window, operand 0, single buffered']
    #allocation3 [shape = 's32[1]{0}', space=sflag, size = 0x4, scoped, tag = 'scoped memory for tpu_custom_call.1']
    #allocation4 [shape = 's32[1]{0}', space=sflag, size = 0x4, scoped, tag = 'scoped memory for tpu_custom_call.1']
    #allocation5 [shape = 'u8[8192]{0}', space=vmem, size = 0x2000, scoped, tag = 'input window, operand 1, single buffered']
    #allocation6 [shape = 's32[1]{0}', space=sflag, size = 0x4, scoped, tag = 'scoped memory for tpu_custom_call.1']
    #allocation7 [shape = 'u8[8192]{0}', space=vmem, size = 0x2000, scoped, tag = 'input window, operand 2, single buffered']
    #allocation8 [shape = 'u8[8192]{0}', space=vmem, size = 0x2000, scoped, tag = 'input window, operand 4, single buffered']
    #allocation9 [shape = 's32[1]{0}', space=sflag, size = 0x4, scoped, tag = 'scoped memory for tpu_custom_call.1']
    #allocation10 [shape = 'u8[8192]{0}', space=vmem, size = 0x2000, scoped, tag = 'input window, operand 7, single buffered']
    #allocation11 [shape = 'u8[1024]{0}', space=vmem, size = 0x400, scoped, tag = 'output window, operand 0, single buffered']
    %14 = vsyncpa [#allocation3], 0
    %15 = vsyncpa [#allocation6], 0
    %16 = vsyncpa [#allocation9], 0
    %17 = vsyncpa [#allocation4], 0
    // Predicated region
    $region2: #{tpu_custom_call.1} parent=1 // pred_check
      _
    $region3: #{tpu_custom_call.1} parent=1 // pred_check_branch
      %19 = sbr.rel (0) target = $region5
    $region4: #{tpu_custom_call.1} parent=1 // pred_region
      %s21 = ssub.s32 128, 128
      %22 = vsyncadd [#allocation3], %s21
      %s23 = sshll.u32 [#allocation2], 4
      %s24 = int_to_ptr.vmem [resolvable:$true] %s23
      %29 = dma.hbm_to_vmem [thread:$0]  %s0, 128, %s24, [#allocation3], 64, 64, 4
    $region5: #{tpu_custom_call.1} parent=1 // pred_fallthru
      _
    // Predicated region
    $region6: #{tpu_custom_call.1} parent=1 // pred_check
      _
    $region7: #{tpu_custom_call.1} parent=1 // pred_check_branch
      %31 = sbr.rel (0) target = $region9
    $region8: #{tpu_custom_call.1} parent=1 // pred_region
      %s33 = ssub.s32 256, 256
      %34 = vsyncadd [#allocation6], %s33
      %s35 = sshll.u32 [#allocation5], 4
      %s36 = int_to_ptr.vmem [resolvable:$true] %s35
      %41 = dma.hbm_to_vmem [thread:$0]  %s1, 256, %s36, [#allocation6], 64, 64, 4
    $region9: #{tpu_custom_call.1} parent=1 // pred_fallthru
      _
    // Predicated region
    $region10: #{tpu_custom_call.1} parent=1 // pred_check
      _
    $region11: #{tpu_custom_call.1} parent=1 // pred_check_branch
      %43 = sbr.rel (0) target = $region13
    $region12: #{tpu_custom_call.1} parent=1 // pred_region
      %s45 = ssub.s32 256, 256
      %46 = vsyncadd [#allocation6], %s45
      %s47 = sshll.u32 [#allocation7], 4
      %s48 = int_to_ptr.vmem [resolvable:$true] %s47
      %53 = dma.hbm_to_vmem [thread:$0]  %s2, 256, %s48, [#allocation6], 64, 64, 4
    $region13: #{tpu_custom_call.1} parent=1 // pred_fallthru
      _
    // Predicated region
    $region14: #{tpu_custom_call.1} parent=1 // pred_check
      _
    $region15: #{tpu_custom_call.1} parent=1 // pred_check_branch
      %55 = sbr.rel (0) target = $region17
    $region16: #{tpu_custom_call.1} parent=1 // pred_region
      _
    $region17: #{tpu_custom_call.1} parent=1 // pred_fallthru
      _
    // Predicated region
    $region18: #{tpu_custom_call.1} parent=1 // pred_check
      _
    $region19: #{tpu_custom_call.1} parent=1 // pred_check_branch
      %57 = sbr.rel (0) target = $region21
    $region20: #{tpu_custom_call.1} parent=1 // pred_region
      %s59 = ssub.s32 256, 256
      %60 = vsyncadd [#allocation9], %s59
      %s61 = sshll.u32 [#allocation8], 4
      %s62 = int_to_ptr.vmem [resolvable:$true] %s61
      %67 = dma.hbm_to_vmem [thread:$0]  %s4, 256, %s62, [#allocation9], 64, 64, 4
    $region21: #{tpu_custom_call.1} parent=1 // pred_fallthru
      _
    // Predicated region
    $region22: #{tpu_custom_call.1} parent=1 // pred_check
      _
    $region23: #{tpu_custom_call.1} parent=1 // pred_check_branch
      %69 = sbr.rel (0) target = $region25
    $region24: #{tpu_custom_call.1} parent=1 // pred_region
      _
    $region25: #{tpu_custom_call.1} parent=1 // pred_fallthru
      _
    // Predicated region
    $region26: #{tpu_custom_call.1} parent=1 // pred_check
      _
    $region27: #{tpu_custom_call.1} parent=1 // pred_check_branch
      %71 = sbr.rel (0) target = $region29
    $region28: #{tpu_custom_call.1} parent=1 // pred_region
      _
    $region29: #{tpu_custom_call.1} parent=1 // pred_fallthru
      _
    // Predicated region
    $region30: #{tpu_custom_call.1} parent=1 // pred_check
      _
    $region31: #{tpu_custom_call.1} parent=1 // pred_check_branch
      %73 = sbr.rel (0) target = $region33
    $region32: #{tpu_custom_call.1} parent=1 // pred_region
      %s75 = ssub.s32 256, 256
      %76 = vsyncadd [#allocation9], %s75
      %s77 = sshll.u32 [#allocation10], 4
      %s78 = int_to_ptr.vmem [resolvable:$true] %s77
      %83 = dma.hbm_to_vmem [thread:$0]  %s7, 256, %s78, [#allocation9], 64, 64, 4
    $region33: #{tpu_custom_call.1} parent=1 // pred_fallthru
      _
    // Predicated region
    $region34: #{tpu_custom_call.1} parent=1 // pred_check
      _
    $region35: #{tpu_custom_call.1} parent=1 // pred_check_branch
      %85 = sbr.rel (0) target = $region37
    $region36: #{tpu_custom_call.1} parent=1 // pred_region
      _
    $region37: #{tpu_custom_call.1} parent=1 // pred_fallthru
      _
    // Predicated region
    $region38: #{tpu_custom_call.1} parent=1 // pred_check
      _
    $region39: #{tpu_custom_call.1} parent=1 // pred_check_branch
      %87 = sbr.rel (0) target = $region41
    $region40: #{tpu_custom_call.1} parent=1 // pred_region
      %88 = dma.done [#allocation3], 128
    $region41: #{tpu_custom_call.1} parent=1 // pred_fallthru
      _
    // Predicated region
    $region42: #{tpu_custom_call.1} parent=1 // pred_check
      _
    $region43: #{tpu_custom_call.1} parent=1 // pred_check_branch
      %90 = sbr.rel (0) target = $region45
    $region44: #{tpu_custom_call.1} parent=1 // pred_region
      %91 = dma.done [#allocation6], 256
    $region45: #{tpu_custom_call.1} parent=1 // pred_fallthru
      _
    // Predicated region
    $region46: #{tpu_custom_call.1} parent=1 // pred_check
      _
    $region47: #{tpu_custom_call.1} parent=1 // pred_check_branch
      %93 = sbr.rel (0) target = $region49
    $region48: #{tpu_custom_call.1} parent=1 // pred_region
      %94 = dma.done [#allocation6], 256
    $region49: #{tpu_custom_call.1} parent=1 // pred_fallthru
      _
    // Predicated region
    $region50: #{tpu_custom_call.1} parent=1 // pred_check
      _
    $region51: #{tpu_custom_call.1} parent=1 // pred_check_branch
      %96 = sbr.rel (0) target = $region53
    $region52: #{tpu_custom_call.1} parent=1 // pred_region
      %97 = dma.done [#allocation9], 256
    $region53: #{tpu_custom_call.1} parent=1 // pred_fallthru
      _
    // Predicated region
    $region54: #{tpu_custom_call.1} parent=1 // pred_check
      _
    $region55: #{tpu_custom_call.1} parent=1 // pred_check_branch
      %99 = sbr.rel (0) target = $region57
    $region56: #{tpu_custom_call.1} parent=1 // pred_region
      %100 = dma.done [#allocation9], 256
    $region57: #{tpu_custom_call.1} parent=1 // pred_fallthru
      _
    %v102 = vld [vmem:[#allocation2] sm:$0xf]
    %v103 = vld [vmem:[#allocation2 + $0x4] sm:$0xf]
    %v104 = vld [vmem:[#allocation5] sm:$0xf]
    %v105 = vld [vmem:[#allocation5 + $0x4] sm:$0xf]
    %v106 = vld [vmem:[#allocation5 + $0x8] sm:$0xf]
    %v107 = vld [vmem:[#allocation5 + $0xc] sm:$0xf]
    %v108 = vld [vmem:[%s3] sm:$0x1]
    %v110 = vlaneseq
    %v111 = vshrl.u32 %v110, 7
    %v112 = vsub.s32 0, %v111
    %v113 = vrot.slane %v108, %v112
    %v117 = vunpack.c.l.b16 %v102
    %v118 = vunpack.c.l.b16 %v103
    %v119 = vpack.c.b16 %v118, %v117
    %v124 = vunpack.c.l.b16 %v104
    %v125 = vunpack.c.l.b16 %v105
    %v126 = vunpack.c.l.b16 %v106
    %v127 = vunpack.c.l.b16 %v107
    %v128 = vpack.c.b16 %v125, %v124
    %v129 = vpack.c.b16 %v127, %v126
    %vm132 = vcmask 261120
    %v134 = vsel %vm132, %v119, 0
    %136 = vmatprep.subr.bf16.mxu0 0
    %137 = vmatpush1.bf16.msra.mxu0 %v128
    %138 = vmatprep.subr.bf16.mxu0 0
    %139 = vmatpush1.bf16.msra.mxu0 %v129
    %140 = vmatprep.subr.bf16.mxu0 0
    %141 = vmatpush1.bf16.msra.mxu0 0
    %142 = vmatprep.subr.bf16.mxu0 0
    %143 = vmatpush1.bf16.msra.mxu0 0
    %144 = vmatprep.subr.bf16.mxu0 0
    %145 = vmatpush1.bf16.msra.mxu0 0
    %146 = vmatprep.subr.bf16.mxu0 0
    %147 = vmatpush1.bf16.msra.mxu0 0
    %148 = vmatprep.subr.bf16.mxu0 0
    %149 = vmatpush1.bf16.msra.mxu0 0
    %150 = vmatprep.subr.bf16.mxu0 0
    %151 = vmatpush1.bf16.msra.mxu0 0
    %152 = vmatprep.subr.bf16.mxu0 0
    %153 = vmatpush1.bf16.msra.mxu0 0
    %154 = vmatprep.subr.bf16.mxu0 0
    %155 = vmatpush1.bf16.msra.mxu0 0
    %156 = vmatprep.subr.bf16.mxu0 0
    %157 = vmatpush1.bf16.msra.mxu0 0
    %158 = vmatprep.subr.bf16.mxu0 0
    %159 = vmatpush1.bf16.msra.mxu0 0
    %160 = vmatprep.subr.bf16.mxu0 0
    %161 = vmatpush1.bf16.msra.mxu0 0
    %162 = vmatprep.subr.bf16.mxu0 0
    %163 = vmatpush1.bf16.msra.mxu0 0
    %164 = vmatprep.subr.bf16.mxu0 0
    %165 = vmatpush1.bf16.msra.mxu0 0
    %166 = vmatprep.subr.bf16.mxu0 0
    %167 = vmatpush1.bf16.msra.mxu0 0
    %168 = vmatprep.mubr.bf16.mxu0 0
    %169 = vmatmul.mubr.bf16.gmra.mrb[0].mxu0 %v134
    %v170 = vpop.f32.mrb[0].mxu0
    %v171 = vadd.f32 %v113, %v170
    %v172 = vpop.f32.mrb[0].mxu0
    %v173 = vpop.f32.mrb[0].mxu0
    %v174 = vadd.f32 %v113, %v173
    %v175 = vpop.f32.mrb[0].mxu0
    %176 = vdwg.mxu0
    %v177 = vld [vmem:[#allocation7] sm:$0xf]
    %v178 = vld [vmem:[#allocation7 + $0x4] sm:$0xf]
    %v179 = vld [vmem:[#allocation7 + $0x8] sm:$0xf]
    %v180 = vld [vmem:[#allocation7 + $0xc] sm:$0xf]
    %v185 = vunpack.c.l.b16 %v177
    %v186 = vunpack.c.l.b16 %v178
    %v187 = vunpack.c.l.b16 %v179
    %v188 = vunpack.c.l.b16 %v180
    %v189 = vpack.c.b16 %v186, %v185
    %v190 = vpack.c.b16 %v188, %v187
    %v194 = vsel %vm132, 0, 0
    %196 = vmatprep.subr.bf16.mxu0 0
    %197 = vmatpush1.bf16.msra.mxu0 %v189
    %198 = vmatprep.subr.bf16.mxu0 0
    %199 = vmatpush1.bf16.msra.mxu0 %v190
    %200 = vmatprep.subr.bf16.mxu0 0
    %201 = vmatpush1.bf16.msra.mxu0 0
    %202 = vmatprep.subr.bf16.mxu0 0
    %203 = vmatpush1.bf16.msra.mxu0 0
    %204 = vmatprep.subr.bf16.mxu0 0
    %205 = vmatpush1.bf16.msra.mxu0 0
    %206 = vmatprep.subr.bf16.mxu0 0
    %207 = vmatpush1.bf16.msra.mxu0 0
    %208 = vmatprep.subr.bf16.mxu0 0
    %209 = vmatpush1.bf16.msra.mxu0 0
    %210 = vmatprep.subr.bf16.mxu0 0
    %211 = vmatpush1.bf16.msra.mxu0 0
    %212 = vmatprep.subr.bf16.mxu0 0
    %213 = vmatpush1.bf16.msra.mxu0 0
    %214 = vmatprep.subr.bf16.mxu0 0
    %215 = vmatpush1.bf16.msra.mxu0 0
    %216 = vmatprep.subr.bf16.mxu0 0
    %217 = vmatpush1.bf16.msra.mxu0 0
    %218 = vmatprep.subr.bf16.mxu0 0
    %219 = vmatpush1.bf16.msra.mxu0 0
    %220 = vmatprep.subr.bf16.mxu0 0
    %221 = vmatpush1.bf16.msra.mxu0 0
    %222 = vmatprep.subr.bf16.mxu0 0
    %223 = vmatpush1.bf16.msra.mxu0 0
    %224 = vmatprep.subr.bf16.mxu0 0
    %225 = vmatpush1.bf16.msra.mxu0 0
    %226 = vmatprep.subr.bf16.mxu0 0
    %227 = vmatpush1.bf16.msra.mxu0 0
    %228 = vmatprep.mubr.bf16.mxu0 0
    %229 = vmatmul.mubr.bf16.gmra.mrb[0].mxu0 %v194
    %v230 = vpop.f32.mrb[0].mxu0
    %v231 = vadd.f32 0.0, %v230
    %v232 = vpop.f32.mrb[0].mxu0
    %v233 = vpop.f32.mrb[0].mxu0
    %v234 = vpop.f32.mrb[0].mxu0
    %235 = vdwg.mxu0
    %v236 = vadd.f32 %v171, %v231
    %v237 = vxor.u32 %v236, 2147483648
    %v238 = vmul.f32 %v237, 1.442695
    %v239 = vpow.pop %v238
    %v240 = vadd.f32 %v239, 1.0
    %v241 = vrcp.pop %v240
    %v242 = vmul.f32 1.0, %v241
    %v243 = vtanh.pop %v236
    %v244 = vmul.f32 %v242, 0.0
    %246 = vrot.lane.b32.xlu0 %v243, 64
    %v247 = vpop.permute.xlu0 %246
    %v249 = vmul.f32 %v242, %v247
    %251 = vrot.lane.b32.xlu0 %v249, 32
    %v252 = vpop.permute.xlu0 %251
    %v254 = vadd.f32 %v244, %v252
    %v255 = vtanh.pop %v254
    %257 = vrot.lane.b32.xlu0 %v255, 64
    %v258 = vpop.permute.xlu0 %257
    %v260 = vmul.f32 %v242, %v258
    %v261 = vpack.c.bf16 %v260, %v260
    %v262 = vld [vmem:[#allocation8] sm:$0xf]
    %v263 = vld [vmem:[#allocation8 + $0x4] sm:$0xf]
    %v264 = vld [vmem:[#allocation8 + $0x8] sm:$0xf]
    %v265 = vld [vmem:[#allocation8 + $0xc] sm:$0xf]
    %v266 = vld [vmem:[%s6] sm:$0x1]
    %v268 = vlaneseq
    %v269 = vshrl.u32 %v268, 7
    %v270 = vsub.s32 0, %v269
    %v271 = vrot.slane %v266, %v270
    %274 = vrot.lane.b32.xlu0 %v261, 32
    %v275 = vpop.permute.xlu0 %274
    %v280 = vunpack.c.l.b16 %v262
    %v281 = vunpack.c.l.b16 %v263
    %v282 = vunpack.c.l.b16 %v264
    %v283 = vunpack.c.l.b16 %v265
    %v284 = vpack.c.b16 %v281, %v280
    %v285 = vpack.c.b16 %v283, %v282
    %v289 = vsel %vm132, %v275, 0
    %291 = vmatprep.subr.bf16.mxu0 0
    %292 = vmatpush1.bf16.msra.mxu0 %v284
    %293 = vmatprep.subr.bf16.mxu0 0
    %294 = vmatpush1.bf16.msra.mxu0 %v285
    %295 = vmatprep.subr.bf16.mxu0 0
    %296 = vmatpush1.bf16.msra.mxu0 0
    %297 = vmatprep.subr.bf16.mxu0 0
    %298 = vmatpush1.bf16.msra.mxu0 0
    %299 = vmatprep.subr.bf16.mxu0 0
    %300 = vmatpush1.bf16.msra.mxu0 0
    %301 = vmatprep.subr.bf16.mxu0 0
    %302 = vmatpush1.bf16.msra.mxu0 0
    %303 = vmatprep.subr.bf16.mxu0 0
    %304 = vmatpush1.bf16.msra.mxu0 0
    %305 = vmatprep.subr.bf16.mxu0 0
    %306 = vmatpush1.bf16.msra.mxu0 0
    %307 = vmatprep.subr.bf16.mxu0 0
    %308 = vmatpush1.bf16.msra.mxu0 0
    %309 = vmatprep.subr.bf16.mxu0 0
    %310 = vmatpush1.bf16.msra.mxu0 0
    %311 = vmatprep.subr.bf16.mxu0 0
    %312 = vmatpush1.bf16.msra.mxu0 0
    %313 = vmatprep.subr.bf16.mxu0 0
    %314 = vmatpush1.bf16.msra.mxu0 0
    %315 = vmatprep.subr.bf16.mxu0 0
    %316 = vmatpush1.bf16.msra.mxu0 0
    %317 = vmatprep.subr.bf16.mxu0 0
    %318 = vmatpush1.bf16.msra.mxu0 0
    %319 = vmatprep.subr.bf16.mxu0 0
    %320 = vmatpush1.bf16.msra.mxu0 0
    %321 = vmatprep.subr.bf16.mxu0 0
    %322 = vmatpush1.bf16.msra.mxu0 0
    %323 = vmatprep.mubr.bf16.mxu0 0
    %324 = vmatmul.mubr.bf16.gmra.mrb[0].mxu0 %v289
    %v325 = vpop.f32.mrb[0].mxu0
    %v326 = vadd.f32 %v271, %v325
    %v327 = vpop.f32.mrb[0].mxu0
    %v328 = vpop.f32.mrb[0].mxu0
    %v329 = vpop.f32.mrb[0].mxu0
    %330 = vdwg.mxu0
    %331 = vmatprep.subr.bf16.mxu0 0
    %332 = vmatpush1.bf16.msra.mxu0 %v189
    %333 = vmatprep.subr.bf16.mxu0 0
    %334 = vmatpush1.bf16.msra.mxu0 %v190
    %335 = vmatprep.subr.bf16.mxu0 0
    %336 = vmatpush1.bf16.msra.mxu0 0
    %337 = vmatprep.subr.bf16.mxu0 0
    %338 = vmatpush1.bf16.msra.mxu0 0
    %339 = vmatprep.subr.bf16.mxu0 0
    %340 = vmatpush1.bf16.msra.mxu0 0
    %341 = vmatprep.subr.bf16.mxu0 0
    %342 = vmatpush1.bf16.msra.mxu0 0
    %343 = vmatprep.subr.bf16.mxu0 0
    %344 = vmatpush1.bf16.msra.mxu0 0
    %345 = vmatprep.subr.bf16.mxu0 0
    %346 = vmatpush1.bf16.msra.mxu0 0
    %347 = vmatprep.subr.bf16.mxu0 0
    %348 = vmatpush1.bf16.msra.mxu0 0
    %349 = vmatprep.subr.bf16.mxu0 0
    %350 = vmatpush1.bf16.msra.mxu0 0
    %351 = vmatprep.subr.bf16.mxu0 0
    %352 = vmatpush1.bf16.msra.mxu0 0
    %353 = vmatprep.subr.bf16.mxu0 0
    %354 = vmatpush1.bf16.msra.mxu0 0
    %355 = vmatprep.subr.bf16.mxu0 0
    %356 = vmatpush1.bf16.msra.mxu0 0
    %357 = vmatprep.subr.bf16.mxu0 0
    %358 = vmatpush1.bf16.msra.mxu0 0
    %359 = vmatprep.subr.bf16.mxu0 0
    %360 = vmatpush1.bf16.msra.mxu0 0
    %361 = vmatprep.subr.bf16.mxu0 0
    %362 = vmatpush1.bf16.msra.mxu0 0
    %363 = vmatprep.mubr.bf16.mxu0 0
    %364 = vmatmul.mubr.bf16.gmra.mrb[0].mxu0 %v289
    %v365 = vpop.f32.mrb[0].mxu0
    %v366 = vadd.f32 0.0, %v365
    %v367 = vpop.f32.mrb[0].mxu0
    %v368 = vpop.f32.mrb[0].mxu0
    %v369 = vpop.f32.mrb[0].mxu0
    %370 = vdwg.mxu0
    %v372 = vrot.slane %v366, 6
    %v374 = vadd.f32 %v171, %v372
    %v375 = vxor.u32 %v374, 2147483648
    %v376 = vmul.f32 %v375, 1.442695
    %v377 = vpow.pop %v376
    %v378 = vadd.f32 %v377, 1.0
    %v379 = vrcp.pop %v378
    %v380 = vmul.f32 1.0, %v379
    %v381 = vtanh.pop %v374
    %v383 = vrot.slane %v254, 6
    %v385 = vmul.f32 %v380, %v383
    %387 = vrot.lane.b32.xlu0 %v381, 64
    %v388 = vpop.permute.xlu0 %387
    %v390 = vmul.f32 %v380, %v388
    %392 = vrot.lane.b32.xlu0 %v390, 32
    %v393 = vpop.permute.xlu0 %392
    %v395 = vadd.f32 %v385, %v393
    %v396 = vtanh.pop %v395
    %398 = vrot.lane.b32.xlu0 %v396, 64
    %v399 = vpop.permute.xlu0 %398
    %v401 = vmul.f32 %v380, %v399
    %v402 = vpack.c.bf16 %v401, %v401
    %v404 = vrot.slane %v402, 1
    %405 = vrot.lane.b32.xlu0 %v404, 32
    %v406 = vpop.permute.xlu0 %405
    %v408 = vsel %vm132, %v406, 0
    %410 = vmatprep.subr.bf16.mxu0 0
    %411 = vmatpush1.bf16.msra.mxu0 %v284
    %412 = vmatprep.subr.bf16.mxu0 0
    %413 = vmatpush1.bf16.msra.mxu0 %v285
    %414 = vmatprep.subr.bf16.mxu0 0
    %415 = vmatpush1.bf16.msra.mxu0 0
    %416 = vmatprep.subr.bf16.mxu0 0
    %417 = vmatpush1.bf16.msra.mxu0 0
    %418 = vmatprep.subr.bf16.mxu0 0
    %419 = vmatpush1.bf16.msra.mxu0 0
    %420 = vmatprep.subr.bf16.mxu0 0
    %421 = vmatpush1.bf16.msra.mxu0 0
    %422 = vmatprep.subr.bf16.mxu0 0
    %423 = vmatpush1.bf16.msra.mxu0 0
    %424 = vmatprep.subr.bf16.mxu0 0
    %425 = vmatpush1.bf16.msra.mxu0 0
    %426 = vmatprep.subr.bf16.mxu0 0
    %427 = vmatpush1.bf16.msra.mxu0 0
    %428 = vmatprep.subr.bf16.mxu0 0
    %429 = vmatpush1.bf16.msra.mxu0 0
    %430 = vmatprep.subr.bf16.mxu0 0
    %431 = vmatpush1.bf16.msra.mxu0 0
    %432 = vmatprep.subr.bf16.mxu0 0
    %433 = vmatpush1.bf16.msra.mxu0 0
    %434 = vmatprep.subr.bf16.mxu0 0
    %435 = vmatpush1.bf16.msra.mxu0 0
    %436 = vmatprep.subr.bf16.mxu0 0
    %437 = vmatpush1.bf16.msra.mxu0 0
    %438 = vmatprep.subr.bf16.mxu0 0
    %439 = vmatpush1.bf16.msra.mxu0 0
    %440 = vmatprep.subr.bf16.mxu0 0
    %441 = vmatpush1.bf16.msra.mxu0 0
    %442 = vmatprep.mubr.bf16.mxu0 0
    %443 = vmatmul.mubr.bf16.gmra.mrb[0].mxu0 %v408
    %v444 = vpop.f32.mrb[0].mxu0
    %v445 = vadd.f32 %v271, %v444
    %v446 = vpop.f32.mrb[0].mxu0
    %v447 = vpop.f32.mrb[0].mxu0
    %v448 = vpop.f32.mrb[0].mxu0
    %449 = vdwg.mxu0
    %450 = vmatprep.subr.bf16.mxu0 0
    %451 = vmatpush1.bf16.msra.mxu0 %v189
    %452 = vmatprep.subr.bf16.mxu0 0
    %453 = vmatpush1.bf16.msra.mxu0 %v190
    %454 = vmatprep.subr.bf16.mxu0 0
    %455 = vmatpush1.bf16.msra.mxu0 0
    %456 = vmatprep.subr.bf16.mxu0 0
    %457 = vmatpush1.bf16.msra.mxu0 0
    %458 = vmatprep.subr.bf16.mxu0 0
    %459 = vmatpush1.bf16.msra.mxu0 0
    %460 = vmatprep.subr.bf16.mxu0 0
    %461 = vmatpush1.bf16.msra.mxu0 0
    %462 = vmatprep.subr.bf16.mxu0 0
    %463 = vmatpush1.bf16.msra.mxu0 0
    %464 = vmatprep.subr.bf16.mxu0 0
    %465 = vmatpush1.bf16.msra.mxu0 0
    %466 = vmatprep.subr.bf16.mxu0 0
    %467 = vmatpush1.bf16.msra.mxu0 0
    %468 = vmatprep.subr.bf16.mxu0 0
    %469 = vmatpush1.bf16.msra.mxu0 0
    %470 = vmatprep.subr.bf16.mxu0 0
    %471 = vmatpush1.bf16.msra.mxu0 0
    %472 = vmatprep.subr.bf16.mxu0 0
    %473 = vmatpush1.bf16.msra.mxu0 0
    %474 = vmatprep.subr.bf16.mxu0 0
    %475 = vmatpush1.bf16.msra.mxu0 0
    %476 = vmatprep.subr.bf16.mxu0 0
    %477 = vmatpush1.bf16.msra.mxu0 0
    %478 = vmatprep.subr.bf16.mxu0 0
    %479 = vmatpush1.bf16.msra.mxu0 0
    %480 = vmatprep.subr.bf16.mxu0 0
    %481 = vmatpush1.bf16.msra.mxu0 0
    %482 = vmatprep.mubr.bf16.mxu0 0
    %483 = vmatmul.mubr.bf16.gmra.mrb[0].mxu0 %v408
    %v484 = vpop.f32.mrb[0].mxu0
    %v485 = vadd.f32 0.0, %v484
    %v486 = vpop.f32.mrb[0].mxu0
    %v487 = vpop.f32.mrb[0].mxu0
    %v488 = vpop.f32.mrb[0].mxu0
    %489 = vdwg.mxu0
    %v491 = vrot.slane %v485, 4
    %v493 = vadd.f32 %v171, %v491
    %v494 = vxor.u32 %v493, 2147483648
    %v495 = vmul.f32 %v494, 1.442695
    %v496 = vpow.pop %v495
    %v497 = vadd.f32 %v496, 1.0
    %v498 = vrcp.pop %v497
    %v499 = vmul.f32 1.0, %v498
    %v500 = vtanh.pop %v493
    %v502 = vrot.slane %v395, 6
    %v504 = vmul.f32 %v499, %v502
    %506 = vrot.lane.b32.xlu0 %v500, 64
    %v507 = vpop.permute.xlu0 %506
    %v509 = vmul.f32 %v499, %v507
    %511 = vrot.lane.b32.xlu0 %v509, 32
    %v512 = vpop.permute.xlu0 %511
    %v514 = vadd.f32 %v504, %v512
    %v515 = vtanh.pop %v514
    %517 = vrot.lane.b32.xlu0 %v515, 64
    %v518 = vpop.permute.xlu0 %517
    %v520 = vmul.f32 %v499, %v518
    %v521 = vpack.c.bf16 %v520, %v520
    %v523 = vrot.slane %v521, 2
    %524 = vrot.lane.b32.xlu0 %v523, 32
    %v525 = vpop.permute.xlu0 %524
    %v527 = vsel %vm132, %v525, 0
    %529 = vmatprep.subr.bf16.mxu0 0
    %530 = vmatpush1.bf16.msra.mxu0 %v284
    %531 = vmatprep.subr.bf16.mxu0 0
    %532 = vmatpush1.bf16.msra.mxu0 %v285
    %533 = vmatprep.subr.bf16.mxu0 0
    %534 = vmatpush1.bf16.msra.mxu0 0
    %535 = vmatprep.subr.bf16.mxu0 0
    %536 = vmatpush1.bf16.msra.mxu0 0
    %537 = vmatprep.subr.bf16.mxu0 0
    %538 = vmatpush1.bf16.msra.mxu0 0
    %539 = vmatprep.subr.bf16.mxu0 0
    %540 = vmatpush1.bf16.msra.mxu0 0
    %541 = vmatprep.subr.bf16.mxu0 0
    %542 = vmatpush1.bf16.msra.mxu0 0
    %543 = vmatprep.subr.bf16.mxu0 0
    %544 = vmatpush1.bf16.msra.mxu0 0
    %545 = vmatprep.subr.bf16.mxu0 0
    %546 = vmatpush1.bf16.msra.mxu0 0
    %547 = vmatprep.subr.bf16.mxu0 0
    %548 = vmatpush1.bf16.msra.mxu0 0
    %549 = vmatprep.subr.bf16.mxu0 0
    %550 = vmatpush1.bf16.msra.mxu0 0
    %551 = vmatprep.subr.bf16.mxu0 0
    %552 = vmatpush1.bf16.msra.mxu0 0
    %553 = vmatprep.subr.bf16.mxu0 0
    %554 = vmatpush1.bf16.msra.mxu0 0
    %555 = vmatprep.subr.bf16.mxu0 0
    %556 = vmatpush1.bf16.msra.mxu0 0
    %557 = vmatprep.subr.bf16.mxu0 0
    %558 = vmatpush1.bf16.msra.mxu0 0
    %559 = vmatprep.subr.bf16.mxu0 0
    %560 = vmatpush1.bf16.msra.mxu0 0
    %561 = vmatprep.mubr.bf16.mxu0 0
    %562 = vmatmul.mubr.bf16.gmra.mrb[0].mxu0 %v527
    %v563 = vpop.f32.mrb[0].mxu0
    %v564 = vadd.f32 %v271, %v563
    %v565 = vpop.f32.mrb[0].mxu0
    %v566 = vpop.f32.mrb[0].mxu0
    %v567 = vpop.f32.mrb[0].mxu0
    %568 = vdwg.mxu0
    %569 = vmatprep.subr.bf16.mxu0 0
    %570 = vmatpush1.bf16.msra.mxu0 %v189
    %571 = vmatprep.subr.bf16.mxu0 0
    %572 = vmatpush1.bf16.msra.mxu0 %v190
    %573 = vmatprep.subr.bf16.mxu0 0
    %574 = vmatpush1.bf16.msra.mxu0 0
    %575 = vmatprep.subr.bf16.mxu0 0
    %576 = vmatpush1.bf16.msra.mxu0 0
    %577 = vmatprep.subr.bf16.mxu0 0
    %578 = vmatpush1.bf16.msra.mxu0 0
    %579 = vmatprep.subr.bf16.mxu0 0
    %580 = vmatpush1.bf16.msra.mxu0 0
    %581 = vmatprep.subr.bf16.mxu0 0
    %582 = vmatpush1.bf16.msra.mxu0 0
    %583 = vmatprep.subr.bf16.mxu0 0
    %584 = vmatpush1.bf16.msra.mxu0 0
    %585 = vmatprep.subr.bf16.mxu0 0
    %586 = vmatpush1.bf16.msra.mxu0 0
    %587 = vmatprep.subr.bf16.mxu0 0
    %588 = vmatpush1.bf16.msra.mxu0 0
    %589 = vmatprep.subr.bf16.mxu0 0
    %590 = vmatpush1.bf16.msra.mxu0 0
    %591 = vmatprep.subr.bf16.mxu0 0
    %592 = vmatpush1.bf16.msra.mxu0 0
    %593 = vmatprep.subr.bf16.mxu0 0
    %594 = vmatpush1.bf16.msra.mxu0 0
    %595 = vmatprep.subr.bf16.mxu0 0
    %596 = vmatpush1.bf16.msra.mxu0 0
    %597 = vmatprep.subr.bf16.mxu0 0
    %598 = vmatpush1.bf16.msra.mxu0 0
    %599 = vmatprep.subr.bf16.mxu0 0
    %600 = vmatpush1.bf16.msra.mxu0 0
    %601 = vmatprep.mubr.bf16.mxu0 0
    %602 = vmatmul.mubr.bf16.gmra.mrb[0].mxu0 %v527
    %v603 = vpop.f32.mrb[0].mxu0
    %v604 = vadd.f32 0.0, %v603
    %v605 = vpop.f32.mrb[0].mxu0
    %v606 = vpop.f32.mrb[0].mxu0
    %v607 = vpop.f32.mrb[0].mxu0
    %608 = vdwg.mxu0
    %v610 = vrot.slane %v604, 2
    %v612 = vadd.f32 %v171, %v610
    %v613 = vxor.u32 %v612, 2147483648
    %v614 = vmul.f32 %v613, 1.442695
    %v615 = vpow.pop %v614
    %v616 = vadd.f32 %v615, 1.0
    %v617 = vrcp.pop %v616
    %v618 = vmul.f32 1.0, %v617
    %v619 = vtanh.pop %v612
    %v621 = vrot.slane %v514, 6
    %v623 = vmul.f32 %v618, %v621
    %625 = vrot.lane.b32.xlu0 %v619, 64
    %v626 = vpop.permute.xlu0 %625
    %v628 = vmul.f32 %v618, %v626
    %630 = vrot.lane.b32.xlu0 %v628, 32
    %v631 = vpop.permute.xlu0 %630
    %v633 = vadd.f32 %v623, %v631
    %v634 = vtanh.pop %v633
    %636 = vrot.lane.b32.xlu0 %v634, 64
    %v637 = vpop.permute.xlu0 %636
    %v639 = vmul.f32 %v618, %v637
    %v640 = vpack.c.bf16 %v639, %v639
    %v642 = vrot.slane %v640, 3
    %643 = vrot.lane.b32.xlu0 %v642, 32
    %v644 = vpop.permute.xlu0 %643
    %v646 = vsel %vm132, %v644, 0
    %648 = vmatprep.subr.bf16.mxu0 0
    %649 = vmatpush1.bf16.msra.mxu0 %v284
    %650 = vmatprep.subr.bf16.mxu0 0
    %651 = vmatpush1.bf16.msra.mxu0 %v285
    %652 = vmatprep.subr.bf16.mxu0 0
    %653 = vmatpush1.bf16.msra.mxu0 0
    %654 = vmatprep.subr.bf16.mxu0 0
    %655 = vmatpush1.bf16.msra.mxu0 0
    %656 = vmatprep.subr.bf16.mxu0 0
    %657 = vmatpush1.bf16.msra.mxu0 0
    %658 = vmatprep.subr.bf16.mxu0 0
    %659 = vmatpush1.bf16.msra.mxu0 0
    %660 = vmatprep.subr.bf16.mxu0 0
    %661 = vmatpush1.bf16.msra.mxu0 0
    %662 = vmatprep.subr.bf16.mxu0 0
    %663 = vmatpush1.bf16.msra.mxu0 0
    %664 = vmatprep.subr.bf16.mxu0 0
    %665 = vmatpush1.bf16.msra.mxu0 0
    %666 = vmatprep.subr.bf16.mxu0 0
    %667 = vmatpush1.bf16.msra.mxu0 0
    %668 = vmatprep.subr.bf16.mxu0 0
    %669 = vmatpush1.bf16.msra.mxu0 0
    %670 = vmatprep.subr.bf16.mxu0 0
    %671 = vmatpush1.bf16.msra.mxu0 0
    %672 = vmatprep.subr.bf16.mxu0 0
    %673 = vmatpush1.bf16.msra.mxu0 0
    %674 = vmatprep.subr.bf16.mxu0 0
    %675 = vmatpush1.bf16.msra.mxu0 0
    %676 = vmatprep.subr.bf16.mxu0 0
    %677 = vmatpush1.bf16.msra.mxu0 0
    %678 = vmatprep.subr.bf16.mxu0 0
    %679 = vmatpush1.bf16.msra.mxu0 0
    %680 = vmatprep.mubr.bf16.mxu0 0
    %681 = vmatmul.mubr.bf16.gmra.mrb[0].mxu0 %v646
    %v682 = vpop.f32.mrb[0].mxu0
    %v683 = vadd.f32 %v271, %v682
    %v684 = vpop.f32.mrb[0].mxu0
    %v685 = vpop.f32.mrb[0].mxu0
    %v686 = vpop.f32.mrb[0].mxu0
    %687 = vdwg.mxu0
    %688 = vmatprep.subr.bf16.mxu0 0
    %689 = vmatpush1.bf16.msra.mxu0 %v189
    %690 = vmatprep.subr.bf16.mxu0 0
    %691 = vmatpush1.bf16.msra.mxu0 %v190
    %692 = vmatprep.subr.bf16.mxu0 0
    %693 = vmatpush1.bf16.msra.mxu0 0
    %694 = vmatprep.subr.bf16.mxu0 0
    %695 = vmatpush1.bf16.msra.mxu0 0
    %696 = vmatprep.subr.bf16.mxu0 0
    %697 = vmatpush1.bf16.msra.mxu0 0
    %698 = vmatprep.subr.bf16.mxu0 0
    %699 = vmatpush1.bf16.msra.mxu0 0
    %700 = vmatprep.subr.bf16.mxu0 0
    %701 = vmatpush1.bf16.msra.mxu0 0
    %702 = vmatprep.subr.bf16.mxu0 0
    %703 = vmatpush1.bf16.msra.mxu0 0
    %704 = vmatprep.subr.bf16.mxu0 0
    %705 = vmatpush1.bf16.msra.mxu0 0
    %706 = vmatprep.subr.bf16.mxu0 0
    %707 = vmatpush1.bf16.msra.mxu0 0
    %708 = vmatprep.subr.bf16.mxu0 0
    %709 = vmatpush1.bf16.msra.mxu0 0
    %710 = vmatprep.subr.bf16.mxu0 0
    %711 = vmatpush1.bf16.msra.mxu0 0
    %712 = vmatprep.subr.bf16.mxu0 0
    %713 = vmatpush1.bf16.msra.mxu0 0
    %714 = vmatprep.subr.bf16.mxu0 0
    %715 = vmatpush1.bf16.msra.mxu0 0
    %716 = vmatprep.subr.bf16.mxu0 0
    %717 = vmatpush1.bf16.msra.mxu0 0
    %718 = vmatprep.subr.bf16.mxu0 0
    %719 = vmatpush1.bf16.msra.mxu0 0
    %720 = vmatprep.mubr.bf16.mxu0 0
    %721 = vmatmul.mubr.bf16.gmra.mrb[0].mxu0 %v646
    %v722 = vpop.f32.mrb[0].mxu0
    %v723 = vadd.f32 0.0, %v722
    %v724 = vpop.f32.mrb[0].mxu0
    %v725 = vpop.f32.mrb[0].mxu0
    %v726 = vpop.f32.mrb[0].mxu0
    %727 = vdwg.mxu0
    %v728 = vadd.f32 %v174, %v723
    %v729 = vxor.u32 %v728, 2147483648
    %v730 = vmul.f32 %v729, 1.442695
    %v731 = vpow.pop %v730
    %v732 = vadd.f32 %v731, 1.0
    %v733 = vrcp.pop %v732
    %v734 = vmul.f32 1.0, %v733
    %v735 = vtanh.pop %v728
    %v737 = vrot.slane %v633, 6
    %v739 = vmul.f32 %v734, %v737
    %741 = vrot.lane.b32.xlu0 %v735, 64
    %v742 = vpop.permute.xlu0 %741
    %v744 = vmul.f32 %v734, %v742
    %746 = vrot.lane.b32.xlu0 %v744, 32
    %v747 = vpop.permute.xlu0 %746
    %v749 = vadd.f32 %v739, %v747
    %v750 = vtanh.pop %v749
    %752 = vrot.lane.b32.xlu0 %v750, 64
    %v753 = vpop.permute.xlu0 %752
    %v755 = vmul.f32 %v734, %v753
    %v756 = vpack.c.bf16 %v755, %v755
    %758 = vrot.lane.b32.xlu0 %v756, 32
    %v759 = vpop.permute.xlu0 %758
    %v761 = vsel %vm132, %v759, 0
    %763 = vmatprep.subr.bf16.mxu0 0
    %764 = vmatpush1.bf16.msra.mxu0 %v284
    %765 = vmatprep.subr.bf16.mxu0 0
    %766 = vmatpush1.bf16.msra.mxu0 %v285
    %767 = vmatprep.subr.bf16.mxu0 0
    %768 = vmatpush1.bf16.msra.mxu0 0
    %769 = vmatprep.subr.bf16.mxu0 0
    %770 = vmatpush1.bf16.msra.mxu0 0
    %771 = vmatprep.subr.bf16.mxu0 0
    %772 = vmatpush1.bf16.msra.mxu0 0
    %773 = vmatprep.subr.bf16.mxu0 0
    %774 = vmatpush1.bf16.msra.mxu0 0
    %775 = vmatprep.subr.bf16.mxu0 0
    %776 = vmatpush1.bf16.msra.mxu0 0
    %777 = vmatprep.subr.bf16.mxu0 0
    %778 = vmatpush1.bf16.msra.mxu0 0
    %779 = vmatprep.subr.bf16.mxu0 0
    %780 = vmatpush1.bf16.msra.mxu0 0
    %781 = vmatprep.subr.bf16.mxu0 0
    %782 = vmatpush1.bf16.msra.mxu0 0
    %783 = vmatprep.subr.bf16.mxu0 0
    %784 = vmatpush1.bf16.msra.mxu0 0
    %785 = vmatprep.subr.bf16.mxu0 0
    %786 = vmatpush1.bf16.msra.mxu0 0
    %787 = vmatprep.subr.bf16.mxu0 0
    %788 = vmatpush1.bf16.msra.mxu0 0
    %789 = vmatprep.subr.bf16.mxu0 0
    %790 = vmatpush1.bf16.msra.mxu0 0
    %791 = vmatprep.subr.bf16.mxu0 0
    %792 = vmatpush1.bf16.msra.mxu0 0
    %793 = vmatprep.subr.bf16.mxu0 0
    %794 = vmatpush1.bf16.msra.mxu0 0
    %795 = vmatprep.mubr.bf16.mxu0 0
    %796 = vmatmul.mubr.bf16.gmra.mrb[0].mxu0 %v761
    %v797 = vpop.f32.mrb[0].mxu0
    %v798 = vadd.f32 %v271, %v797
    %v799 = vpop.f32.mrb[0].mxu0
    %v800 = vpop.f32.mrb[0].mxu0
    %v801 = vpop.f32.mrb[0].mxu0
    %802 = vdwg.mxu0
    %803 = vmatprep.subr.bf16.mxu0 0
    %804 = vmatpush1.bf16.msra.mxu0 %v189
    %805 = vmatprep.subr.bf16.mxu0 0
    %806 = vmatpush1.bf16.msra.mxu0 %v190
    %807 = vmatprep.subr.bf16.mxu0 0
    %808 = vmatpush1.bf16.msra.mxu0 0
    %809 = vmatprep.subr.bf16.mxu0 0
    %810 = vmatpush1.bf16.msra.mxu0 0
    %811 = vmatprep.subr.bf16.mxu0 0
    %812 = vmatpush1.bf16.msra.mxu0 0
    %813 = vmatprep.subr.bf16.mxu0 0
    %814 = vmatpush1.bf16.msra.mxu0 0
    %815 = vmatprep.subr.bf16.mxu0 0
    %816 = vmatpush1.bf16.msra.mxu0 0
    %817 = vmatprep.subr.bf16.mxu0 0
    %818 = vmatpush1.bf16.msra.mxu0 0
    %819 = vmatprep.subr.bf16.mxu0 0
    %820 = vmatpush1.bf16.msra.mxu0 0
    %821 = vmatprep.subr.bf16.mxu0 0
    %822 = vmatpush1.bf16.msra.mxu0 0
    %823 = vmatprep.subr.bf16.mxu0 0
    %824 = vmatpush1.bf16.msra.mxu0 0
    %825 = vmatprep.subr.bf16.mxu0 0
    %826 = vmatpush1.bf16.msra.mxu0 0
    %827 = vmatprep.subr.bf16.mxu0 0
    %828 = vmatpush1.bf16.msra.mxu0 0
    %829 = vmatprep.subr.bf16.mxu0 0
    %830 = vmatpush1.bf16.msra.mxu0 0
    %831 = vmatprep.subr.bf16.mxu0 0
    %832 = vmatpush1.bf16.msra.mxu0 0
    %833 = vmatprep.subr.bf16.mxu0 0
    %834 = vmatpush1.bf16.msra.mxu0 0
    %835 = vmatprep.mubr.bf16.mxu0 0
    %836 = vmatmul.mubr.bf16.gmra.mrb[0].mxu0 %v761
    %v837 = vpop.f32.mrb[0].mxu0
    %v838 = vadd.f32 0.0, %v837
    %v839 = vpop.f32.mrb[0].mxu0
    %v840 = vpop.f32.mrb[0].mxu0
    %v841 = vpop.f32.mrb[0].mxu0
    %842 = vdwg.mxu0
    %v844 = vrot.slane %v838, 6
    %v846 = vadd.f32 %v174, %v844
    %v847 = vxor.u32 %v846, 2147483648
    %v848 = vmul.f32 %v847, 1.442695
    %v849 = vpow.pop %v848
    %v850 = vadd.f32 %v849, 1.0
    %v851 = vrcp.pop %v850
    %v852 = vmul.f32 1.0, %v851
    %v853 = vtanh.pop %v846
    %v855 = vrot.slane %v749, 6
    %v857 = vmul.f32 %v852, %v855
    %859 = vrot.lane.b32.xlu0 %v853, 64
    %v860 = vpop.permute.xlu0 %859
    %v862 = vmul.f32 %v852, %v860
    %864 = vrot.lane.b32.xlu0 %v862, 32
    %v865 = vpop.permute.xlu0 %864
    %v867 = vadd.f32 %v857, %v865
    %v868 = vtanh.pop %v867
    %870 = vrot.lane.b32.xlu0 %v868, 64
    %v871 = vpop.permute.xlu0 %870
    %v873 = vmul.f32 %v852, %v871
    %v874 = vpack.c.bf16 %v873, %v873
    %v876 = vrot.slane %v874, 1
    %877 = vrot.lane.b32.xlu0 %v876, 32
    %v878 = vpop.permute.xlu0 %877
    %v880 = vsel %vm132, %v878, 0
    %882 = vmatprep.subr.bf16.mxu0 0
    %883 = vmatpush1.bf16.msra.mxu0 %v284
    %884 = vmatprep.subr.bf16.mxu0 0
    %885 = vmatpush1.bf16.msra.mxu0 %v285
    %886 = vmatprep.subr.bf16.mxu0 0
    %887 = vmatpush1.bf16.msra.mxu0 0
    %888 = vmatprep.subr.bf16.mxu0 0
    %889 = vmatpush1.bf16.msra.mxu0 0
    %890 = vmatprep.subr.bf16.mxu0 0
    %891 = vmatpush1.bf16.msra.mxu0 0
    %892 = vmatprep.subr.bf16.mxu0 0
    %893 = vmatpush1.bf16.msra.mxu0 0
    %894 = vmatprep.subr.bf16.mxu0 0
    %895 = vmatpush1.bf16.msra.mxu0 0
    %896 = vmatprep.subr.bf16.mxu0 0
    %897 = vmatpush1.bf16.msra.mxu0 0
    %898 = vmatprep.subr.bf16.mxu0 0
    %899 = vmatpush1.bf16.msra.mxu0 0
    %900 = vmatprep.subr.bf16.mxu0 0
    %901 = vmatpush1.bf16.msra.mxu0 0
    %902 = vmatprep.subr.bf16.mxu0 0
    %903 = vmatpush1.bf16.msra.mxu0 0
    %904 = vmatprep.subr.bf16.mxu0 0
    %905 = vmatpush1.bf16.msra.mxu0 0
    %906 = vmatprep.subr.bf16.mxu0 0
    %907 = vmatpush1.bf16.msra.mxu0 0
    %908 = vmatprep.subr.bf16.mxu0 0
    %909 = vmatpush1.bf16.msra.mxu0 0
    %910 = vmatprep.subr.bf16.mxu0 0
    %911 = vmatpush1.bf16.msra.mxu0 0
    %912 = vmatprep.subr.bf16.mxu0 0
    %913 = vmatpush1.bf16.msra.mxu0 0
    %914 = vmatprep.mubr.bf16.mxu0 0
    %915 = vmatmul.mubr.bf16.gmra.mrb[0].mxu0 %v880
    %v916 = vpop.f32.mrb[0].mxu0
    %v917 = vadd.f32 %v271, %v916
    %v918 = vpop.f32.mrb[0].mxu0
    %v919 = vpop.f32.mrb[0].mxu0
    %v920 = vpop.f32.mrb[0].mxu0
    %921 = vdwg.mxu0
    %922 = vmatprep.subr.bf16.mxu0 0
    %923 = vmatpush1.bf16.msra.mxu0 %v189
    %924 = vmatprep.subr.bf16.mxu0 0
    %925 = vmatpush1.bf16.msra.mxu0 %v190
    %926 = vmatprep.subr.bf16.mxu0 0
    %927 = vmatpush1.bf16.msra.mxu0 0
    %928 = vmatprep.subr.bf16.mxu0 0
    %929 = vmatpush1.bf16.msra.mxu0 0
    %930 = vmatprep.subr.bf16.mxu0 0
    %931 = vmatpush1.bf16.msra.mxu0 0
    %932 = vmatprep.subr.bf16.mxu0 0
    %933 = vmatpush1.bf16.msra.mxu0 0
    %934 = vmatprep.subr.bf16.mxu0 0
    %935 = vmatpush1.bf16.msra.mxu0 0
    %936 = vmatprep.subr.bf16.mxu0 0
    %937 = vmatpush1.bf16.msra.mxu0 0
    %938 = vmatprep.subr.bf16.mxu0 0
    %939 = vmatpush1.bf16.msra.mxu0 0
    %940 = vmatprep.subr.bf16.mxu0 0
    %941 = vmatpush1.bf16.msra.mxu0 0
    %942 = vmatprep.subr.bf16.mxu0 0
    %943 = vmatpush1.bf16.msra.mxu0 0
    %944 = vmatprep.subr.bf16.mxu0 0
    %945 = vmatpush1.bf16.msra.mxu0 0
    %946 = vmatprep.subr.bf16.mxu0 0
    %947 = vmatpush1.bf16.msra.mxu0 0
    %948 = vmatprep.subr.bf16.mxu0 0
    %949 = vmatpush1.bf16.msra.mxu0 0
    %950 = vmatprep.subr.bf16.mxu0 0
    %951 = vmatpush1.bf16.msra.mxu0 0
    %952 = vmatprep.subr.bf16.mxu0 0
    %953 = vmatpush1.bf16.msra.mxu0 0
    %954 = vmatprep.mubr.bf16.mxu0 0
    %955 = vmatmul.mubr.bf16.gmra.mrb[0].mxu0 %v880
    %v956 = vpop.f32.mrb[0].mxu0
    %v957 = vadd.f32 0.0, %v956
    %v958 = vpop.f32.mrb[0].mxu0
    %v959 = vpop.f32.mrb[0].mxu0
    %v960 = vpop.f32.mrb[0].mxu0
    %961 = vdwg.mxu0
    %v963 = vrot.slane %v957, 4
    %v965 = vadd.f32 %v174, %v963
    %v966 = vxor.u32 %v965, 2147483648
    %v967 = vmul.f32 %v966, 1.442695
    %v968 = vpow.pop %v967
    %v969 = vadd.f32 %v968, 1.0
    %v970 = vrcp.pop %v969
    %v971 = vmul.f32 1.0, %v970
    %v972 = vtanh.pop %v965
    %v974 = vrot.slane %v867, 6
    %v976 = vmul.f32 %v971, %v974
    %978 = vrot.lane.b32.xlu0 %v972, 64
    %v979 = vpop.permute.xlu0 %978
    %v981 = vmul.f32 %v971, %v979
    %983 = vrot.lane.b32.xlu0 %v981, 32
    %v984 = vpop.permute.xlu0 %983
    %v986 = vadd.f32 %v976, %v984
    %v987 = vtanh.pop %v986
    %989 = vrot.lane.b32.xlu0 %v987, 64
    %v990 = vpop.permute.xlu0 %989
    %v992 = vmul.f32 %v971, %v990
    %v993 = vpack.c.bf16 %v992, %v992
    %v995 = vrot.slane %v993, 2
    %996 = vrot.lane.b32.xlu0 %v995, 32
    %v997 = vpop.permute.xlu0 %996
    %v999 = vsel %vm132, %v997, 0
    %1001 = vmatprep.subr.bf16.mxu0 0
    %1002 = vmatpush1.bf16.msra.mxu0 %v284
    %1003 = vmatprep.subr.bf16.mxu0 0
    %1004 = vmatpush1.bf16.msra.mxu0 %v285
    %1005 = vmatprep.subr.bf16.mxu0 0
    %1006 = vmatpush1.bf16.msra.mxu0 0
    %1007 = vmatprep.subr.bf16.mxu0 0
    %1008 = vmatpush1.bf16.msra.mxu0 0
    %1009 = vmatprep.subr.bf16.mxu0 0
    %1010 = vmatpush1.bf16.msra.mxu0 0
    %1011 = vmatprep.subr.bf16.mxu0 0
    %1012 = vmatpush1.bf16.msra.mxu0 0
    %1013 = vmatprep.subr.bf16.mxu0 0
    %1014 = vmatpush1.bf16.msra.mxu0 0
    %1015 = vmatprep.subr.bf16.mxu0 0
    %1016 = vmatpush1.bf16.msra.mxu0 0
    %1017 = vmatprep.subr.bf16.mxu0 0
    %1018 = vmatpush1.bf16.msra.mxu0 0
    %1019 = vmatprep.subr.bf16.mxu0 0
    %1020 = vmatpush1.bf16.msra.mxu0 0
    %1021 = vmatprep.subr.bf16.mxu0 0
    %1022 = vmatpush1.bf16.msra.mxu0 0
    %1023 = vmatprep.subr.bf16.mxu0 0
    %1024 = vmatpush1.bf16.msra.mxu0 0
    %1025 = vmatprep.subr.bf16.mxu0 0
    %1026 = vmatpush1.bf16.msra.mxu0 0
    %1027 = vmatprep.subr.bf16.mxu0 0
    %1028 = vmatpush1.bf16.msra.mxu0 0
    %1029 = vmatprep.subr.bf16.mxu0 0
    %1030 = vmatpush1.bf16.msra.mxu0 0
    %1031 = vmatprep.subr.bf16.mxu0 0
    %1032 = vmatpush1.bf16.msra.mxu0 0
    %1033 = vmatprep.mubr.bf16.mxu0 0
    %1034 = vmatmul.mubr.bf16.gmra.mrb[0].mxu0 %v999
    %v1035 = vpop.f32.mrb[0].mxu0
    %v1036 = vadd.f32 %v271, %v1035
    %v1037 = vpop.f32.mrb[0].mxu0
    %v1038 = vpop.f32.mrb[0].mxu0
    %v1039 = vpop.f32.mrb[0].mxu0
    %1040 = vdwg.mxu0
    %1041 = vmatprep.subr.bf16.mxu0 0
    %1042 = vmatpush1.bf16.msra.mxu0 %v189
    %1043 = vmatprep.subr.bf16.mxu0 0
    %1044 = vmatpush1.bf16.msra.mxu0 %v190
    %1045 = vmatprep.subr.bf16.mxu0 0
    %1046 = vmatpush1.bf16.msra.mxu0 0
    %1047 = vmatprep.subr.bf16.mxu0 0
    %1048 = vmatpush1.bf16.msra.mxu0 0
    %1049 = vmatprep.subr.bf16.mxu0 0
    %1050 = vmatpush1.bf16.msra.mxu0 0
    %1051 = vmatprep.subr.bf16.mxu0 0
    %1052 = vmatpush1.bf16.msra.mxu0 0
    %1053 = vmatprep.subr.bf16.mxu0 0
    %1054 = vmatpush1.bf16.msra.mxu0 0
    %1055 = vmatprep.subr.bf16.mxu0 0
    %1056 = vmatpush1.bf16.msra.mxu0 0
    %1057 = vmatprep.subr.bf16.mxu0 0
    %1058 = vmatpush1.bf16.msra.mxu0 0
    %1059 = vmatprep.subr.bf16.mxu0 0
    %1060 = vmatpush1.bf16.msra.mxu0 0
    %1061 = vmatprep.subr.bf16.mxu0 0
    %1062 = vmatpush1.bf16.msra.mxu0 0
    %1063 = vmatprep.subr.bf16.mxu0 0
    %1064 = vmatpush1.bf16.msra.mxu0 0
    %1065 = vmatprep.subr.bf16.mxu0 0
    %1066 = vmatpush1.bf16.msra.mxu0 0
    %1067 = vmatprep.subr.bf16.mxu0 0
    %1068 = vmatpush1.bf16.msra.mxu0 0
    %1069 = vmatprep.subr.bf16.mxu0 0
    %1070 = vmatpush1.bf16.msra.mxu0 0
    %1071 = vmatprep.subr.bf16.mxu0 0
    %1072 = vmatpush1.bf16.msra.mxu0 0
    %1073 = vmatprep.mubr.bf16.mxu0 0
    %1074 = vmatmul.mubr.bf16.gmra.mrb[0].mxu0 %v999
    %v1075 = vpop.f32.mrb[0].mxu0
    %v1076 = vadd.f32 0.0, %v1075
    %v1077 = vpop.f32.mrb[0].mxu0
    %v1078 = vpop.f32.mrb[0].mxu0
    %v1079 = vpop.f32.mrb[0].mxu0
    %1080 = vdwg.mxu0
    %v1082 = vrot.slane %v1076, 2
    %v1084 = vadd.f32 %v174, %v1082
    %v1085 = vxor.u32 %v1084, 2147483648
    %v1086 = vmul.f32 %v1085, 1.442695
    %v1087 = vpow.pop %v1086
    %v1088 = vadd.f32 %v1087, 1.0
    %v1089 = vrcp.pop %v1088
    %v1090 = vmul.f32 1.0, %v1089
    %v1091 = vtanh.pop %v1084
    %v1093 = vrot.slane %v986, 6
    %v1095 = vmul.f32 %v1090, %v1093
    %1097 = vrot.lane.b32.xlu0 %v1091, 64
    %v1098 = vpop.permute.xlu0 %1097
    %v1100 = vmul.f32 %v1090, %v1098
    %1102 = vrot.lane.b32.xlu0 %v1100, 32
    %v1103 = vpop.permute.xlu0 %1102
    %v1105 = vadd.f32 %v1095, %v1103
    %v1106 = vtanh.pop %v1105
    %1108 = vrot.lane.b32.xlu0 %v1106, 64
    %v1109 = vpop.permute.xlu0 %1108
    %v1111 = vmul.f32 %v1090, %v1109
    %v1112 = vpack.c.bf16 %v1111, %v1111
    %v1114 = vrot.slane %v1112, 3
    %1115 = vrot.lane.b32.xlu0 %v1114, 32
    %v1116 = vpop.permute.xlu0 %1115
    %v1118 = vsel %vm132, %v1116, 0
    %1120 = vmatprep.subr.bf16.mxu0 0
    %1121 = vmatpush1.bf16.msra.mxu0 %v284
    %1122 = vmatprep.subr.bf16.mxu0 0
    %1123 = vmatpush1.bf16.msra.mxu0 %v285
    %1124 = vmatprep.subr.bf16.mxu0 0
    %1125 = vmatpush1.bf16.msra.mxu0 0
    %1126 = vmatprep.subr.bf16.mxu0 0
    %1127 = vmatpush1.bf16.msra.mxu0 0
    %1128 = vmatprep.subr.bf16.mxu0 0
    %1129 = vmatpush1.bf16.msra.mxu0 0
    %1130 = vmatprep.subr.bf16.mxu0 0
    %1131 = vmatpush1.bf16.msra.mxu0 0
    %1132 = vmatprep.subr.bf16.mxu0 0
    %1133 = vmatpush1.bf16.msra.mxu0 0
    %1134 = vmatprep.subr.bf16.mxu0 0
    %1135 = vmatpush1.bf16.msra.mxu0 0
    %1136 = vmatprep.subr.bf16.mxu0 0
    %1137 = vmatpush1.bf16.msra.mxu0 0
    %1138 = vmatprep.subr.bf16.mxu0 0
    %1139 = vmatpush1.bf16.msra.mxu0 0
    %1140 = vmatprep.subr.bf16.mxu0 0
    %1141 = vmatpush1.bf16.msra.mxu0 0
    %1142 = vmatprep.subr.bf16.mxu0 0
    %1143 = vmatpush1.bf16.msra.mxu0 0
    %1144 = vmatprep.subr.bf16.mxu0 0
    %1145 = vmatpush1.bf16.msra.mxu0 0
    %1146 = vmatprep.subr.bf16.mxu0 0
    %1147 = vmatpush1.bf16.msra.mxu0 0
    %1148 = vmatprep.subr.bf16.mxu0 0
    %1149 = vmatpush1.bf16.msra.mxu0 0
    %1150 = vmatprep.subr.bf16.mxu0 0
    %1151 = vmatpush1.bf16.msra.mxu0 0
    %1152 = vmatprep.mubr.bf16.mxu0 0
    %1153 = vmatmul.mubr.bf16.gmra.mrb[0].mxu0 %v1118
    %v1154 = vpop.f32.mrb[0].mxu0
    %v1155 = vadd.f32 %v271, %v1154
    %v1156 = vpop.f32.mrb[0].mxu0
    %v1157 = vpop.f32.mrb[0].mxu0
    %v1158 = vpop.f32.mrb[0].mxu0
    %1159 = vdwg.mxu0
    %v1160 = vld [vmem:[%s5] sm:$0xf]
    %v1161 = vld [vmem:[%s5 + $0x4] sm:$0xf]
    %v1162 = vld [vmem:[%s5 + $0x8] sm:$0xf]
    %v1163 = vld [vmem:[%s5 + $0xc] sm:$0xf]
    %v1168 = vunpack.c.l.b16 %v1160
    %v1169 = vunpack.c.l.b16 %v1161
    %v1170 = vunpack.c.l.b16 %v1162
    %v1171 = vunpack.c.l.b16 %v1163
    %v1172 = vpack.c.b16 %v1169, %v1168
    %v1173 = vpack.c.b16 %v1171, %v1170
    %1176 = vmatprep.subr.bf16.mxu0 0
    %1177 = vmatpush1.bf16.msra.mxu0 %v1172
    %1178 = vmatprep.subr.bf16.mxu0 0
    %1179 = vmatpush1.bf16.msra.mxu0 %v1173
    %1180 = vmatprep.subr.bf16.mxu0 0
    %1181 = vmatpush1.bf16.msra.mxu0 0
    %1182 = vmatprep.subr.bf16.mxu0 0
    %1183 = vmatpush1.bf16.msra.mxu0 0
    %1184 = vmatprep.subr.bf16.mxu0 0
    %1185 = vmatpush1.bf16.msra.mxu0 0
    %1186 = vmatprep.subr.bf16.mxu0 0
    %1187 = vmatpush1.bf16.msra.mxu0 0
    %1188 = vmatprep.subr.bf16.mxu0 0
    %1189 = vmatpush1.bf16.msra.mxu0 0
    %1190 = vmatprep.subr.bf16.mxu0 0
    %1191 = vmatpush1.bf16.msra.mxu0 0
    %1192 = vmatprep.subr.bf16.mxu0 0
    %1193 = vmatpush1.bf16.msra.mxu0 0
    %1194 = vmatprep.subr.bf16.mxu0 0
    %1195 = vmatpush1.bf16.msra.mxu0 0
    %1196 = vmatprep.subr.bf16.mxu0 0
    %1197 = vmatpush1.bf16.msra.mxu0 0
    %1198 = vmatprep.subr.bf16.mxu0 0
    %1199 = vmatpush1.bf16.msra.mxu0 0
    %1200 = vmatprep.subr.bf16.mxu0 0
    %1201 = vmatpush1.bf16.msra.mxu0 0
    %1202 = vmatprep.subr.bf16.mxu0 0
    %1203 = vmatpush1.bf16.msra.mxu0 0
    %1204 = vmatprep.subr.bf16.mxu0 0
    %1205 = vmatpush1.bf16.msra.mxu0 0
    %1206 = vmatprep.subr.bf16.mxu0 0
    %1207 = vmatpush1.bf16.msra.mxu0 0
    %1208 = vmatprep.mubr.bf16.mxu0 0
    %1209 = vmatmul.mubr.bf16.gmra.mrb[0].mxu0 %v194
    %v1210 = vpop.f32.mrb[0].mxu0
    %v1211 = vadd.f32 0.0, %v1210
    %v1212 = vpop.f32.mrb[0].mxu0
    %v1213 = vpop.f32.mrb[0].mxu0
    %v1214 = vpop.f32.mrb[0].mxu0
    %1215 = vdwg.mxu0
    %v1216 = vadd.f32 %v326, %v1211
    %v1217 = vxor.u32 %v1216, 2147483648
    %v1218 = vmul.f32 %v1217, 1.442695
    %v1219 = vpow.pop %v1218
    %v1220 = vadd.f32 %v1219, 1.0
    %v1221 = vrcp.pop %v1220
    %v1222 = vmul.f32 1.0, %v1221
    %v1223 = vtanh.pop %v1216
    %v1224 = vmul.f32 %v1222, 0.0
    %1226 = vrot.lane.b32.xlu0 %v1223, 64
    %v1227 = vpop.permute.xlu0 %1226
    %v1229 = vmul.f32 %v1222, %v1227
    %1231 = vrot.lane.b32.xlu0 %v1229, 32
    %v1232 = vpop.permute.xlu0 %1231
    %v1234 = vadd.f32 %v1224, %v1232
    %v1235 = vtanh.pop %v1234
    %1237 = vrot.lane.b32.xlu0 %v1235, 64
    %v1238 = vpop.permute.xlu0 %1237
    %v1240 = vmul.f32 %v1222, %v1238
    %v1241 = vpack.c.bf16 %v1240, %v1240
    %1243 = vrot.lane.b32.xlu0 %v1241, 32
    %v1244 = vpop.permute.xlu0 %1243
    %v1246 = vsel %vm132, %v1244, 0
    %1248 = vmatprep.subr.bf16.mxu0 0
    %1249 = vmatpush1.bf16.msra.mxu0 %v1172
    %1250 = vmatprep.subr.bf16.mxu0 0
    %1251 = vmatpush1.bf16.msra.mxu0 %v1173
    %1252 = vmatprep.subr.bf16.mxu0 0
    %1253 = vmatpush1.bf16.msra.mxu0 0
    %1254 = vmatprep.subr.bf16.mxu0 0
    %1255 = vmatpush1.bf16.msra.mxu0 0
    %1256 = vmatprep.subr.bf16.mxu0 0
    %1257 = vmatpush1.bf16.msra.mxu0 0
    %1258 = vmatprep.subr.bf16.mxu0 0
    %1259 = vmatpush1.bf16.msra.mxu0 0
    %1260 = vmatprep.subr.bf16.mxu0 0
    %1261 = vmatpush1.bf16.msra.mxu0 0
    %1262 = vmatprep.subr.bf16.mxu0 0
    %1263 = vmatpush1.bf16.msra.mxu0 0
    %1264 = vmatprep.subr.bf16.mxu0 0
    %1265 = vmatpush1.bf16.msra.mxu0 0
    %1266 = vmatprep.subr.bf16.mxu0 0
    %1267 = vmatpush1.bf16.msra.mxu0 0
    %1268 = vmatprep.subr.bf16.mxu0 0
    %1269 = vmatpush1.bf16.msra.mxu0 0
    %1270 = vmatprep.subr.bf16.mxu0 0
    %1271 = vmatpush1.bf16.msra.mxu0 0
    %1272 = vmatprep.subr.bf16.mxu0 0
    %1273 = vmatpush1.bf16.msra.mxu0 0
    %1274 = vmatprep.subr.bf16.mxu0 0
    %1275 = vmatpush1.bf16.msra.mxu0 0
    %1276 = vmatprep.subr.bf16.mxu0 0
    %1277 = vmatpush1.bf16.msra.mxu0 0
    %1278 = vmatprep.subr.bf16.mxu0 0
    %1279 = vmatpush1.bf16.msra.mxu0 0
    %1280 = vmatprep.mubr.bf16.mxu0 0
    %1281 = vmatmul.mubr.bf16.gmra.mrb[0].mxu0 %v1246
    %v1282 = vpop.f32.mrb[0].mxu0
    %v1283 = vadd.f32 0.0, %v1282
    %v1284 = vpop.f32.mrb[0].mxu0
    %v1285 = vpop.f32.mrb[0].mxu0
    %v1286 = vpop.f32.mrb[0].mxu0
    %1287 = vdwg.mxu0
    %v1288 = vadd.f32 %v445, %v1283
    %v1289 = vxor.u32 %v1288, 2147483648
    %v1290 = vmul.f32 %v1289, 1.442695
    %v1291 = vpow.pop %v1290
    %v1292 = vadd.f32 %v1291, 1.0
    %v1293 = vrcp.pop %v1292
    %v1294 = vmul.f32 1.0, %v1293
    %v1295 = vtanh.pop %v1288
    %v1296 = vmul.f32 %v1294, %v1234
    %1298 = vrot.lane.b32.xlu0 %v1295, 64
    %v1299 = vpop.permute.xlu0 %1298
    %v1301 = vmul.f32 %v1294, %v1299
    %1303 = vrot.lane.b32.xlu0 %v1301, 32
    %v1304 = vpop.permute.xlu0 %1303
    %v1306 = vadd.f32 %v1296, %v1304
    %v1307 = vtanh.pop %v1306
    %1309 = vrot.lane.b32.xlu0 %v1307, 64
    %v1310 = vpop.permute.xlu0 %1309
    %v1312 = vmul.f32 %v1294, %v1310
    %v1313 = vpack.c.bf16 %v1312, %v1312
    %1315 = vrot.lane.b32.xlu0 %v1313, 32
    %v1316 = vpop.permute.xlu0 %1315
    %v1318 = vsel %vm132, %v1316, 0
    %1320 = vmatprep.subr.bf16.mxu0 0
    %1321 = vmatpush1.bf16.msra.mxu0 %v1172
    %1322 = vmatprep.subr.bf16.mxu0 0
    %1323 = vmatpush1.bf16.msra.mxu0 %v1173
    %1324 = vmatprep.subr.bf16.mxu0 0
    %1325 = vmatpush1.bf16.msra.mxu0 0
    %1326 = vmatprep.subr.bf16.mxu0 0
    %1327 = vmatpush1.bf16.msra.mxu0 0
    %1328 = vmatprep.subr.bf16.mxu0 0
    %1329 = vmatpush1.bf16.msra.mxu0 0
    %1330 = vmatprep.subr.bf16.mxu0 0
    %1331 = vmatpush1.bf16.msra.mxu0 0
    %1332 = vmatprep.subr.bf16.mxu0 0
    %1333 = vmatpush1.bf16.msra.mxu0 0
    %1334 = vmatprep.subr.bf16.mxu0 0
    %1335 = vmatpush1.bf16.msra.mxu0 0
    %1336 = vmatprep.subr.bf16.mxu0 0
    %1337 = vmatpush1.bf16.msra.mxu0 0
    %1338 = vmatprep.subr.bf16.mxu0 0
    %1339 = vmatpush1.bf16.msra.mxu0 0
    %1340 = vmatprep.subr.bf16.mxu0 0
    %1341 = vmatpush1.bf16.msra.mxu0 0
    %1342 = vmatprep.subr.bf16.mxu0 0
    %1343 = vmatpush1.bf16.msra.mxu0 0
    %1344 = vmatprep.subr.bf16.mxu0 0
    %1345 = vmatpush1.bf16.msra.mxu0 0
    %1346 = vmatprep.subr.bf16.mxu0 0
    %1347 = vmatpush1.bf16.msra.mxu0 0
    %1348 = vmatprep.subr.bf16.mxu0 0
    %1349 = vmatpush1.bf16.msra.mxu0 0
    %1350 = vmatprep.subr.bf16.mxu0 0
    %1351 = vmatpush1.bf16.msra.mxu0 0
    %1352 = vmatprep.mubr.bf16.mxu0 0
    %1353 = vmatmul.mubr.bf16.gmra.mrb[0].mxu0 %v1318
    %v1354 = vpop.f32.mrb[0].mxu0
    %v1355 = vadd.f32 0.0, %v1354
    %v1356 = vpop.f32.mrb[0].mxu0
    %v1357 = vpop.f32.mrb[0].mxu0
    %v1358 = vpop.f32.mrb[0].mxu0
    %1359 = vdwg.mxu0
    %v1360 = vadd.f32 %v564, %v1355
    %v1361 = vxor.u32 %v1360, 2147483648
    %v1362 = vmul.f32 %v1361, 1.442695
    %v1363 = vpow.pop %v1362
    %v1364 = vadd.f32 %v1363, 1.0
    %v1365 = vrcp.pop %v1364
    %v1366 = vmul.f32 1.0, %v1365
    %v1367 = vtanh.pop %v1360
    %v1368 = vmul.f32 %v1366, %v1306
    %1370 = vrot.lane.b32.xlu0 %v1367, 64
    %v1371 = vpop.permute.xlu0 %1370
    %v1373 = vmul.f32 %v1366, %v1371
    %1375 = vrot.lane.b32.xlu0 %v1373, 32
    %v1376 = vpop.permute.xlu0 %1375
    %v1378 = vadd.f32 %v1368, %v1376
    %v1379 = vtanh.pop %v1378
    %1381 = vrot.lane.b32.xlu0 %v1379, 64
    %v1382 = vpop.permute.xlu0 %1381
    %v1384 = vmul.f32 %v1366, %v1382
    %v1385 = vpack.c.bf16 %v1384, %v1384
    %1387 = vrot.lane.b32.xlu0 %v1385, 32
    %v1388 = vpop.permute.xlu0 %1387
    %v1390 = vsel %vm132, %v1388, 0
    %1392 = vmatprep.subr.bf16.mxu0 0
    %1393 = vmatpush1.bf16.msra.mxu0 %v1172
    %1394 = vmatprep.subr.bf16.mxu0 0
    %1395 = vmatpush1.bf16.msra.mxu0 %v1173
    %1396 = vmatprep.subr.bf16.mxu0 0
    %1397 = vmatpush1.bf16.msra.mxu0 0
    %1398 = vmatprep.subr.bf16.mxu0 0
    %1399 = vmatpush1.bf16.msra.mxu0 0
    %1400 = vmatprep.subr.bf16.mxu0 0
    %1401 = vmatpush1.bf16.msra.mxu0 0
    %1402 = vmatprep.subr.bf16.mxu0 0
    %1403 = vmatpush1.bf16.msra.mxu0 0
    %1404 = vmatprep.subr.bf16.mxu0 0
    %1405 = vmatpush1.bf16.msra.mxu0 0
    %1406 = vmatprep.subr.bf16.mxu0 0
    %1407 = vmatpush1.bf16.msra.mxu0 0
    %1408 = vmatprep.subr.bf16.mxu0 0
    %1409 = vmatpush1.bf16.msra.mxu0 0
    %1410 = vmatprep.subr.bf16.mxu0 0
    %1411 = vmatpush1.bf16.msra.mxu0 0
    %1412 = vmatprep.subr.bf16.mxu0 0
    %1413 = vmatpush1.bf16.msra.mxu0 0
    %1414 = vmatprep.subr.bf16.mxu0 0
    %1415 = vmatpush1.bf16.msra.mxu0 0
    %1416 = vmatprep.subr.bf16.mxu0 0
    %1417 = vmatpush1.bf16.msra.mxu0 0
    %1418 = vmatprep.subr.bf16.mxu0 0
    %1419 = vmatpush1.bf16.msra.mxu0 0
    %1420 = vmatprep.subr.bf16.mxu0 0
    %1421 = vmatpush1.bf16.msra.mxu0 0
    %1422 = vmatprep.subr.bf16.mxu0 0
    %1423 = vmatpush1.bf16.msra.mxu0 0
    %1424 = vmatprep.mubr.bf16.mxu0 0
    %1425 = vmatmul.mubr.bf16.gmra.mrb[0].mxu0 %v1390
    %v1426 = vpop.f32.mrb[0].mxu0
    %v1427 = vadd.f32 0.0, %v1426
    %v1428 = vpop.f32.mrb[0].mxu0
    %v1429 = vpop.f32.mrb[0].mxu0
    %v1430 = vpop.f32.mrb[0].mxu0
    %1431 = vdwg.mxu0
    %v1432 = vadd.f32 %v683, %v1427
    %v1433 = vxor.u32 %v1432, 2147483648
    %v1434 = vmul.f32 %v1433, 1.442695
    %v1435 = vpow.pop %v1434
    %v1436 = vadd.f32 %v1435, 1.0
    %v1437 = vrcp.pop %v1436
    %v1438 = vmul.f32 1.0, %v1437
    %v1439 = vtanh.pop %v1432
    %v1440 = vmul.f32 %v1438, %v1378
    %1442 = vrot.lane.b32.xlu0 %v1439, 64
    %v1443 = vpop.permute.xlu0 %1442
    %v1445 = vmul.f32 %v1438, %v1443
    %1447 = vrot.lane.b32.xlu0 %v1445, 32
    %v1448 = vpop.permute.xlu0 %1447
    %v1450 = vadd.f32 %v1440, %v1448
    %v1451 = vtanh.pop %v1450
    %1453 = vrot.lane.b32.xlu0 %v1451, 64
    %v1454 = vpop.permute.xlu0 %1453
    %v1456 = vmul.f32 %v1438, %v1454
    %v1457 = vpack.c.bf16 %v1456, %v1456
    %1459 = vrot.lane.b32.xlu0 %v1457, 32
    %v1460 = vpop.permute.xlu0 %1459
    %v1462 = vsel %vm132, %v1460, 0
    %1464 = vmatprep.subr.bf16.mxu0 0
    %1465 = vmatpush1.bf16.msra.mxu0 %v1172
    %1466 = vmatprep.subr.bf16.mxu0 0
    %1467 = vmatpush1.bf16.msra.mxu0 %v1173
    %1468 = vmatprep.subr.bf16.mxu0 0
    %1469 = vmatpush1.bf16.msra.mxu0 0
    %1470 = vmatprep.subr.bf16.mxu0 0
    %1471 = vmatpush1.bf16.msra.mxu0 0
    %1472 = vmatprep.subr.bf16.mxu0 0
    %1473 = vmatpush1.bf16.msra.mxu0 0
    %1474 = vmatprep.subr.bf16.mxu0 0
    %1475 = vmatpush1.bf16.msra.mxu0 0
    %1476 = vmatprep.subr.bf16.mxu0 0
    %1477 = vmatpush1.bf16.msra.mxu0 0
    %1478 = vmatprep.subr.bf16.mxu0 0
    %1479 = vmatpush1.bf16.msra.mxu0 0
    %1480 = vmatprep.subr.bf16.mxu0 0
    %1481 = vmatpush1.bf16.msra.mxu0 0
    %1482 = vmatprep.subr.bf16.mxu0 0
    %1483 = vmatpush1.bf16.msra.mxu0 0
    %1484 = vmatprep.subr.bf16.mxu0 0
    %1485 = vmatpush1.bf16.msra.mxu0 0
    %1486 = vmatprep.subr.bf16.mxu0 0
    %1487 = vmatpush1.bf16.msra.mxu0 0
    %1488 = vmatprep.subr.bf16.mxu0 0
    %1489 = vmatpush1.bf16.msra.mxu0 0
    %1490 = vmatprep.subr.bf16.mxu0 0
    %1491 = vmatpush1.bf16.msra.mxu0 0
    %1492 = vmatprep.subr.bf16.mxu0 0
    %1493 = vmatpush1.bf16.msra.mxu0 0
    %1494 = vmatprep.subr.bf16.mxu0 0
    %1495 = vmatpush1.bf16.msra.mxu0 0
    %1496 = vmatprep.mubr.bf16.mxu0 0
    %1497 = vmatmul.mubr.bf16.gmra.mrb[0].mxu0 %v1462
    %v1498 = vpop.f32.mrb[0].mxu0
    %v1499 = vadd.f32 0.0, %v1498
    %v1500 = vpop.f32.mrb[0].mxu0
    %v1501 = vpop.f32.mrb[0].mxu0
    %v1502 = vpop.f32.mrb[0].mxu0
    %1503 = vdwg.mxu0
    %v1504 = vadd.f32 %v798, %v1499
    %v1505 = vxor.u32 %v1504, 2147483648
    %v1506 = vmul.f32 %v1505, 1.442695
    %v1507 = vpow.pop %v1506
    %v1508 = vadd.f32 %v1507, 1.0
    %v1509 = vrcp.pop %v1508
    %v1510 = vmul.f32 1.0, %v1509
    %v1511 = vtanh.pop %v1504
    %v1512 = vmul.f32 %v1510, %v1450
    %1514 = vrot.lane.b32.xlu0 %v1511, 64
    %v1515 = vpop.permute.xlu0 %1514
    %v1517 = vmul.f32 %v1510, %v1515
    %1519 = vrot.lane.b32.xlu0 %v1517, 32
    %v1520 = vpop.permute.xlu0 %1519
    %v1522 = vadd.f32 %v1512, %v1520
    %v1523 = vtanh.pop %v1522
    %1525 = vrot.lane.b32.xlu0 %v1523, 64
    %v1526 = vpop.permute.xlu0 %1525
    %v1528 = vmul.f32 %v1510, %v1526
    %v1529 = vpack.c.bf16 %v1528, %v1528
    %1531 = vrot.lane.b32.xlu0 %v1529, 32
    %v1532 = vpop.permute.xlu0 %1531
    %v1534 = vsel %vm132, %v1532, 0
    %1536 = vmatprep.subr.bf16.mxu0 0
    %1537 = vmatpush1.bf16.msra.mxu0 %v1172
    %1538 = vmatprep.subr.bf16.mxu0 0
    %1539 = vmatpush1.bf16.msra.mxu0 %v1173
    %1540 = vmatprep.subr.bf16.mxu0 0
    %1541 = vmatpush1.bf16.msra.mxu0 0
    %1542 = vmatprep.subr.bf16.mxu0 0
    %1543 = vmatpush1.bf16.msra.mxu0 0
    %1544 = vmatprep.subr.bf16.mxu0 0
    %1545 = vmatpush1.bf16.msra.mxu0 0
    %1546 = vmatprep.subr.bf16.mxu0 0
    %1547 = vmatpush1.bf16.msra.mxu0 0
    %1548 = vmatprep.subr.bf16.mxu0 0
    %1549 = vmatpush1.bf16.msra.mxu0 0
    %1550 = vmatprep.subr.bf16.mxu0 0
    %1551 = vmatpush1.bf16.msra.mxu0 0
    %1552 = vmatprep.subr.bf16.mxu0 0
    %1553 = vmatpush1.bf16.msra.mxu0 0
    %1554 = vmatprep.subr.bf16.mxu0 0
    %1555 = vmatpush1.bf16.msra.mxu0 0
    %1556 = vmatprep.subr.bf16.mxu0 0
    %1557 = vmatpush1.bf16.msra.mxu0 0
    %1558 = vmatprep.subr.bf16.mxu0 0
    %1559 = vmatpush1.bf16.msra.mxu0 0
    %1560 = vmatprep.subr.bf16.mxu0 0
    %1561 = vmatpush1.bf16.msra.mxu0 0
    %1562 = vmatprep.subr.bf16.mxu0 0
    %1563 = vmatpush1.bf16.msra.mxu0 0
    %1564 = vmatprep.subr.bf16.mxu0 0
    %1565 = vmatpush1.bf16.msra.mxu0 0
    %1566 = vmatprep.subr.bf16.mxu0 0
    %1567 = vmatpush1.bf16.msra.mxu0 0
    %1568 = vmatprep.mubr.bf16.mxu0 0
    %1569 = vmatmul.mubr.bf16.gmra.mrb[0].mxu0 %v1534
    %v1570 = vpop.f32.mrb[0].mxu0
    %v1571 = vadd.f32 0.0, %v1570
    %v1572 = vpop.f32.mrb[0].mxu0
    %v1573 = vpop.f32.mrb[0].mxu0
    %v1574 = vpop.f32.mrb[0].mxu0
    %1575 = vdwg.mxu0
    %v1576 = vadd.f32 %v917, %v1571
    %v1577 = vxor.u32 %v1576, 2147483648
    %v1578 = vmul.f32 %v1577, 1.442695
    %v1579 = vpow.pop %v1578
    %v1580 = vadd.f32 %v1579, 1.0
    %v1581 = vrcp.pop %v1580
    %v1582 = vmul.f32 1.0, %v1581
    %v1583 = vtanh.pop %v1576
    %v1584 = vmul.f32 %v1582, %v1522
    %1586 = vrot.lane.b32.xlu0 %v1583, 64
    %v1587 = vpop.permute.xlu0 %1586
    %v1589 = vmul.f32 %v1582, %v1587
    %1591 = vrot.lane.b32.xlu0 %v1589, 32
    %v1592 = vpop.permute.xlu0 %1591
    %v1594 = vadd.f32 %v1584, %v1592
    %v1595 = vtanh.pop %v1594
    %1597 = vrot.lane.b32.xlu0 %v1595, 64
    %v1598 = vpop.permute.xlu0 %1597
    %v1600 = vmul.f32 %v1582, %v1598
    %v1601 = vpack.c.bf16 %v1600, %v1600
    %1603 = vrot.lane.b32.xlu0 %v1601, 32
    %v1604 = vpop.permute.xlu0 %1603
    %v1606 = vsel %vm132, %v1604, 0
    %1608 = vmatprep.subr.bf16.mxu0 0
    %1609 = vmatpush1.bf16.msra.mxu0 %v1172
    %1610 = vmatprep.subr.bf16.mxu0 0
    %1611 = vmatpush1.bf16.msra.mxu0 %v1173
    %1612 = vmatprep.subr.bf16.mxu0 0
    %1613 = vmatpush1.bf16.msra.mxu0 0
    %1614 = vmatprep.subr.bf16.mxu0 0
    %1615 = vmatpush1.bf16.msra.mxu0 0
    %1616 = vmatprep.subr.bf16.mxu0 0
    %1617 = vmatpush1.bf16.msra.mxu0 0
    %1618 = vmatprep.subr.bf16.mxu0 0
    %1619 = vmatpush1.bf16.msra.mxu0 0
    %1620 = vmatprep.subr.bf16.mxu0 0
    %1621 = vmatpush1.bf16.msra.mxu0 0
    %1622 = vmatprep.subr.bf16.mxu0 0
    %1623 = vmatpush1.bf16.msra.mxu0 0
    %1624 = vmatprep.subr.bf16.mxu0 0
    %1625 = vmatpush1.bf16.msra.mxu0 0
    %1626 = vmatprep.subr.bf16.mxu0 0
    %1627 = vmatpush1.bf16.msra.mxu0 0
    %1628 = vmatprep.subr.bf16.mxu0 0
    %1629 = vmatpush1.bf16.msra.mxu0 0
    %1630 = vmatprep.subr.bf16.mxu0 0
    %1631 = vmatpush1.bf16.msra.mxu0 0
    %1632 = vmatprep.subr.bf16.mxu0 0
    %1633 = vmatpush1.bf16.msra.mxu0 0
    %1634 = vmatprep.subr.bf16.mxu0 0
    %1635 = vmatpush1.bf16.msra.mxu0 0
    %1636 = vmatprep.subr.bf16.mxu0 0
    %1637 = vmatpush1.bf16.msra.mxu0 0
    %1638 = vmatprep.subr.bf16.mxu0 0
    %1639 = vmatpush1.bf16.msra.mxu0 0
    %1640 = vmatprep.mubr.bf16.mxu0 0
    %1641 = vmatmul.mubr.bf16.gmra.mrb[0].mxu0 %v1606
    %v1642 = vpop.f32.mrb[0].mxu0
    %v1643 = vadd.f32 0.0, %v1642
    %v1644 = vpop.f32.mrb[0].mxu0
    %v1645 = vpop.f32.mrb[0].mxu0
    %v1646 = vpop.f32.mrb[0].mxu0
    %1647 = vdwg.mxu0
    %v1648 = vadd.f32 %v1036, %v1643
    %v1649 = vxor.u32 %v1648, 2147483648
    %v1650 = vmul.f32 %v1649, 1.442695
    %v1651 = vpow.pop %v1650
    %v1652 = vadd.f32 %v1651, 1.0
    %v1653 = vrcp.pop %v1652
    %v1654 = vmul.f32 1.0, %v1653
    %v1655 = vtanh.pop %v1648
    %v1656 = vmul.f32 %v1654, %v1594
    %1658 = vrot.lane.b32.xlu0 %v1655, 64
    %v1659 = vpop.permute.xlu0 %1658
    %v1661 = vmul.f32 %v1654, %v1659
    %1663 = vrot.lane.b32.xlu0 %v1661, 32
    %v1664 = vpop.permute.xlu0 %1663
    %v1666 = vadd.f32 %v1656, %v1664
    %v1667 = vtanh.pop %v1666
    %1669 = vrot.lane.b32.xlu0 %v1667, 64
    %v1670 = vpop.permute.xlu0 %1669
    %v1672 = vmul.f32 %v1654, %v1670
    %v1673 = vpack.c.bf16 %v1672, %v1672
    %1675 = vrot.lane.b32.xlu0 %v1673, 32
    %v1676 = vpop.permute.xlu0 %1675
    %v1678 = vsel %vm132, %v1676, 0
    %1680 = vmatprep.subr.bf16.mxu0 0
    %1681 = vmatpush1.bf16.msra.mxu0 %v1172
    %1682 = vmatprep.subr.bf16.mxu0 0
    %1683 = vmatpush1.bf16.msra.mxu0 %v1173
    %1684 = vmatprep.subr.bf16.mxu0 0
    %1685 = vmatpush1.bf16.msra.mxu0 0
    %1686 = vmatprep.subr.bf16.mxu0 0
    %1687 = vmatpush1.bf16.msra.mxu0 0
    %1688 = vmatprep.subr.bf16.mxu0 0
    %1689 = vmatpush1.bf16.msra.mxu0 0
    %1690 = vmatprep.subr.bf16.mxu0 0
    %1691 = vmatpush1.bf16.msra.mxu0 0
    %1692 = vmatprep.subr.bf16.mxu0 0
    %1693 = vmatpush1.bf16.msra.mxu0 0
    %1694 = vmatprep.subr.bf16.mxu0 0
    %1695 = vmatpush1.bf16.msra.mxu0 0
    %1696 = vmatprep.subr.bf16.mxu0 0
    %1697 = vmatpush1.bf16.msra.mxu0 0
    %1698 = vmatprep.subr.bf16.mxu0 0
    %1699 = vmatpush1.bf16.msra.mxu0 0
    %1700 = vmatprep.subr.bf16.mxu0 0
    %1701 = vmatpush1.bf16.msra.mxu0 0
    %1702 = vmatprep.subr.bf16.mxu0 0
    %1703 = vmatpush1.bf16.msra.mxu0 0
    %1704 = vmatprep.subr.bf16.mxu0 0
    %1705 = vmatpush1.bf16.msra.mxu0 0
    %1706 = vmatprep.subr.bf16.mxu0 0
    %1707 = vmatpush1.bf16.msra.mxu0 0
    %1708 = vmatprep.subr.bf16.mxu0 0
    %1709 = vmatpush1.bf16.msra.mxu0 0
    %1710 = vmatprep.subr.bf16.mxu0 0
    %1711 = vmatpush1.bf16.msra.mxu0 0
    %1712 = vmatprep.mubr.bf16.mxu0 0
    %1713 = vmatmul.mubr.bf16.gmra.mrb[0].mxu0 %v1678
    %v1714 = vpop.f32.mrb[0].mxu0
    %v1715 = vadd.f32 0.0, %v1714
    %v1716 = vpop.f32.mrb[0].mxu0
    %v1717 = vpop.f32.mrb[0].mxu0
    %v1718 = vpop.f32.mrb[0].mxu0
    %1719 = vdwg.mxu0
    %v1720 = vadd.f32 %v1155, %v1715
    %v1721 = vxor.u32 %v1720, 2147483648
    %v1722 = vmul.f32 %v1721, 1.442695
    %v1723 = vpow.pop %v1722
    %v1724 = vadd.f32 %v1723, 1.0
    %v1725 = vrcp.pop %v1724
    %v1726 = vmul.f32 1.0, %v1725
    %v1727 = vtanh.pop %v1720
    %v1728 = vmul.f32 %v1726, %v1666
    %1730 = vrot.lane.b32.xlu0 %v1727, 64
    %v1731 = vpop.permute.xlu0 %1730
    %v1733 = vmul.f32 %v1726, %v1731
    %1735 = vrot.lane.b32.xlu0 %v1733, 32
    %v1736 = vpop.permute.xlu0 %1735
    %v1738 = vadd.f32 %v1728, %v1736
    %v1739 = vtanh.pop %v1738
    %1741 = vrot.lane.b32.xlu0 %v1739, 64
    %v1742 = vpop.permute.xlu0 %1741
    %v1744 = vmul.f32 %v1726, %v1742
    %v1745 = vpack.c.bf16 %v1744, %v1744
    %v1746 = vld [vmem:[#allocation10] sm:$0xf]
    %v1747 = vld [vmem:[#allocation10 + $0x4] sm:$0xf]
    %v1748 = vld [vmem:[#allocation10 + $0x8] sm:$0xf]
    %v1749 = vld [vmem:[#allocation10 + $0xc] sm:$0xf]
    %v1750 = vld [vmem:[%s8] sm:$0x1]
    %v1752 = vlaneseq
    %v1753 = vshrl.u32 %v1752, 7
    %v1754 = vsub.s32 0, %v1753
    %v1755 = vrot.slane %v1750, %v1754
    %1758 = vrot.lane.b32.xlu0 %v1745, 32
    %v1759 = vpop.permute.xlu0 %1758
    %v1764 = vunpack.c.l.b16 %v1746
    %v1765 = vunpack.c.l.b16 %v1747
    %v1766 = vunpack.c.l.b16 %v1748
    %v1767 = vunpack.c.l.b16 %v1749
    %v1768 = vpack.c.b16 %v1765, %v1764
    %v1769 = vpack.c.b16 %v1767, %v1766
    %v1773 = vsel %vm132, %v1759, 0
    %1775 = vmatprep.subr.bf16.mxu0 0
    %1776 = vmatpush1.bf16.msra.mxu0 %v1768
    %1777 = vmatprep.subr.bf16.mxu0 0
    %1778 = vmatpush1.bf16.msra.mxu0 %v1769
    %1779 = vmatprep.subr.bf16.mxu0 0
    %1780 = vmatpush1.bf16.msra.mxu0 0
    %1781 = vmatprep.subr.bf16.mxu0 0
    %1782 = vmatpush1.bf16.msra.mxu0 0
    %1783 = vmatprep.subr.bf16.mxu0 0
    %1784 = vmatpush1.bf16.msra.mxu0 0
    %1785 = vmatprep.subr.bf16.mxu0 0
    %1786 = vmatpush1.bf16.msra.mxu0 0
    %1787 = vmatprep.subr.bf16.mxu0 0
    %1788 = vmatpush1.bf16.msra.mxu0 0
    %1789 = vmatprep.subr.bf16.mxu0 0
    %1790 = vmatpush1.bf16.msra.mxu0 0
    %1791 = vmatprep.subr.bf16.mxu0 0
    %1792 = vmatpush1.bf16.msra.mxu0 0
    %1793 = vmatprep.subr.bf16.mxu0 0
    %1794 = vmatpush1.bf16.msra.mxu0 0
    %1795 = vmatprep.subr.bf16.mxu0 0
    %1796 = vmatpush1.bf16.msra.mxu0 0
    %1797 = vmatprep.subr.bf16.mxu0 0
    %1798 = vmatpush1.bf16.msra.mxu0 0
    %1799 = vmatprep.subr.bf16.mxu0 0
    %1800 = vmatpush1.bf16.msra.mxu0 0
    %1801 = vmatprep.subr.bf16.mxu0 0
    %1802 = vmatpush1.bf16.msra.mxu0 0
    %1803 = vmatprep.subr.bf16.mxu0 0
    %1804 = vmatpush1.bf16.msra.mxu0 0
    %1805 = vmatprep.subr.bf16.mxu0 0
    %1806 = vmatpush1.bf16.msra.mxu0 0
    %1807 = vmatprep.mubr.bf16.mxu0 0
    %1808 = vmatmul.mubr.bf16.gmra.mrb[0].mxu0 %v1773
    %v1809 = vpop.f32.mrb[0].mxu0
    %v1810 = vadd.f32 %v1755, %v1809
    %v1811 = vpop.f32.mrb[0].mxu0
    %v1812 = vpop.f32.mrb[0].mxu0
    %v1813 = vpop.f32.mrb[0].mxu0
    %1814 = vdwg.mxu0
    %v1815 = vmax.f32 %v1810, 0.0
    %vm1816 = vcmask 254976
    %1817 = vst.msk [vmem:[#allocation11] sm:$0x3] %vm1816, %v1815
    // Predicated region
    $region58: #{tpu_custom_call.1} parent=1 // pred_check
      _
    $region59: #{tpu_custom_call.1} parent=1 // pred_check_branch
      %1819 = sbr.rel (0) target = $region61
    $region60: #{tpu_custom_call.1} parent=1 // pred_region
      %s1821 = ssub.s32 32, 32
      %1822 = vsyncadd [#allocation4], %s1821
      %s1824 = sshll.u32 [#allocation11], 4
      %s1825 = int_to_ptr.vmem [resolvable:$true] %s1824
      %1827 = dma.vmem_to_hbm [thread:$0]  %s1825, 32, %s9, [#allocation4]
    $region61: #{tpu_custom_call.1} parent=1 // pred_fallthru
      _
    // Predicated region
    $region62: #{tpu_custom_call.1} parent=1 // pred_check
      _
    $region63: #{tpu_custom_call.1} parent=1 // pred_check_branch
      %1829 = sbr.rel (0) target = $region65
    $region64: #{tpu_custom_call.1} parent=1 // pred_region
      %1830 = dma.done [#allocation4], 32
    $region65: #{tpu_custom_call.1} parent=1 // pred_fallthru
      _
    %1831 = vsyncpa [#allocation3], 1
    %1832 = vsyncpa [#allocation6], 1
    %1833 = vsyncpa [#allocation9], 1
    %1834 = vsyncpa [#allocation4], 1

</llo_original>
